<compile_context>
chip_gen: v7x
topology: tpu7x:2x2x1
jax: 0.10.0
libtpu: 0.0.40
codegen_flags: <defaults>
</compile_context>

<pallas_src>
import functools

import jax
import jax.numpy as jnp
from jax.experimental import pallas as pl
from jax.experimental.pallas import tpu as pltpu


def _disc_kernel(x_ref, w1_ref, b1_ref, w2_ref, b2_ref, o_ref, *,
                 use_mxu_classifier):
    """Fused 1x1-conv -> LeakyReLU -> 1x1-conv on a (C, t_hw) tile of pixels."""
    # f32 tile straight from HBM; cast to bf16 in VMEM (cheap VPU op) right
    # before the MXU matmul — avoids a separate HBM cast pass in the wrapper.
    x = x_ref[0].astype(jnp.bfloat16)              # (C, t_hw) bf16
    w1 = w1_ref[...]                               # (hidden, C) bf16

    # First 1x1 conv on the MXU: bf16 operands, f32 accumulation.
    h = jnp.dot(w1, x, preferred_element_type=jnp.float32)   # (hidden, t_hw) f32
    h = h + b1_ref[...]                            # b1 is (hidden, 1), broadcasts over lanes
    # LeakyReLU(0.2): max-form (mul + max) — one fewer VALU op per vreg than
    # the cmp+select+mul `where` form; identical result for slope in (0, 1).
    h = jnp.maximum(h, 0.2 * h)

    if use_mxu_classifier:
        # Moderate C_in: MXU has slack, the VPU epilogue is the binding slot,
        # so run the 512->1 projection on the MXU (bf16 operands, f32 acc).
        out = jnp.dot(w2_ref[...], h.astype(jnp.bfloat16),
                      preferred_element_type=jnp.float32)     # (1, t_hw) f32
    else:
        # Large C_in: the first matmul already saturates the MXU — keep the
        # classifier on the VPU (mul) + XLU (cross-sublane reduce) in f32.
        out = jnp.sum(h * w2_ref[...], axis=0, keepdims=True)  # (1, t_hw) f32

    out = out + b2_ref[0]                          # scalar bias from SMEM
    o_ref[0] = out.astype(o_ref.dtype)             # lane-dense (1, t_hw) store


@functools.partial(jax.jit, static_argnames=("t_hw",))
def domain_discriminator_im_forward(x_nchw, w1, b1, w2, b2, *, t_hw=2048):
    """
    Args:
      x_nchw: (N, C_in, H, W) float32
      w1: (512, C_in)  conv1 weight (kernel_size=1, squeezed)
      b1: (512,)       conv1 bias
      w2: (1, 512)     classifier weight (kernel_size=1, squeezed)
      b2: (1,)         classifier bias
    Returns:
      (N, 1, H, W) float32
    """
    N, C, H, W = x_nchw.shape
    hidden = w1.shape[0]
    HW = H * W

    # NCHW consumed directly: a free view to (N, C, H*W); no cast, no pad.
    x3d = x_nchw.reshape(N, C, HW)

    # Spatial tile: multiple of 128, at most t_hw, at most round_up(HW, 128).
    hw_rounded = ((HW + 127) // 128) * 128
    t = max(128, min((t_hw // 128) * 128, hw_rounded))

    # Shrink the tile until the VMEM footprint fits a conservative budget
    # that works across v5e / v6e / v7x.
    def _vmem_estimate(t_):
        x_buf = 2 * C * t_ * 4                    # double-buffered f32 x tile
        w1_buf = 2 * hidden * C * 2               # (double-buffered) bf16 w1
        h_scr = hidden * t_ * (4 + 2)             # f32 h + bf16 cast of h
        misc = 2 * (hidden * 4 + hidden * 2 + t_ * 4) + (1 << 20)
        return x_buf + w1_buf + h_scr + misc

    _BUDGET = 20 << 20                            # ~20 MiB working set target
    while t > 128 and _vmem_estimate(t) > _BUDGET:
        t = max(128, (t // 2 // 128) * 128)
    # Make sure there are at least 2 grid steps so both TensorCores (v7x
    # megacore sharding over "parallel" axes) get work.
    while N * pl.cdiv(HW, t) < 2 and t > 128:
        t = max(128, (t // 2 // 128) * 128)

    vmem_limit = int(min(max(2 * _vmem_estimate(t), 16 << 20), 48 << 20))

    # bf16 MXU operands for the (small) weights; activations cast in-kernel.
    w1_bf = w1.astype(jnp.bfloat16)                       # (hidden, C)
    b1_c = b1.reshape(hidden, 1).astype(jnp.float32)      # (hidden, 1)
    b2_s = b2.reshape(1).astype(jnp.float32)              # (1,) scalar in SMEM

    use_mxu_classifier = C <= 704
    if use_mxu_classifier:
        w2_c = w2.reshape(1, hidden).astype(jnp.bfloat16)   # (1, hidden) for MXU
        w2_spec = pl.BlockSpec((1, hidden), lambda n, j: (0, 0))
    else:
        w2_c = w2.reshape(hidden, 1).astype(jnp.float32)    # (hidden, 1) for VPU
        w2_spec = pl.BlockSpec((hidden, 1), lambda n, j: (0, 0))

    grid = (N, pl.cdiv(HW, t))

    cost = pl.CostEstimate(
        flops=2 * N * HW * C * hidden + 2 * N * HW * hidden,
        transcendentals=0,
        bytes_accessed=N * C * HW * 4 + hidden * C * 2 + hidden * 4
        + hidden * 2 + 4 + N * HW * 4,
    )

    kernel = functools.partial(_disc_kernel,
                               use_mxu_classifier=use_mxu_classifier)

    out3d = pl.pallas_call(
        kernel,
        out_shape=jax.ShapeDtypeStruct((N, 1, HW), jnp.float32),
        grid_spec=pltpu.PrefetchScalarGridSpec(
            num_scalar_prefetch=0,
            grid=grid,
            in_specs=[
                pl.BlockSpec((1, C, t), lambda n, j: (n, 0, j)),       # x tile (f32)
                pl.BlockSpec((hidden, C), lambda n, j: (0, 0)),        # w1 (resident)
                pl.BlockSpec((hidden, 1), lambda n, j: (0, 0)),        # b1 (resident)
                w2_spec,                                               # w2 (resident)
                pl.BlockSpec(memory_space=pltpu.MemorySpace.SMEM),     # b2 scalar
            ],
            out_specs=pl.BlockSpec((1, 1, t), lambda n, j: (n, 0, j)),  # lane-dense
        ),
        compiler_params=pltpu.CompilerParams(
            dimension_semantics=("parallel", "parallel"),
            vmem_limit_bytes=vmem_limit),
        cost_estimate=cost,
    )(x3d, w1_bf, b1_c, w2_c, b2_s)

    return out3d.reshape(N, 1, H, W)


def _reference_forward(x_nchw, w1, b1, w2, b2):
    """Plain-JAX f32 reference of the PyTorch forward (for verification)."""
    N, C, H, W = x_nchw.shape
    x2d = jnp.transpose(x_nchw, (0, 2, 3, 1)).reshape(-1, C)
    h = x2d @ w1.T + b1
    h = jnp.where(h > 0, h, 0.2 * h)
    o = h @ w2.T + b2
    return jnp.transpose(o.reshape(N, H, W, 1), (0, 3, 1, 2))


def _run_case(key, N, C_in, H, W, hidden=512):
    kx, kw1, kb1, kw2, kb2 = jax.random.split(key, 5)
    x = jax.random.normal(kx, (N, C_in, H, W), dtype=jnp.float32)
    w1 = jax.random.normal(kw1, (hidden, C_in), dtype=jnp.float32) * 0.05
    b1 = jax.random.normal(kb1, (hidden,), dtype=jnp.float32) * 0.05
    w2 = jax.random.normal(kw2, (1, hidden), dtype=jnp.float32) * 0.05
    b2 = jax.random.normal(kb2, (1,), dtype=jnp.float32) * 0.05

    out = domain_discriminator_im_forward(x, w1, b1, w2, b2)
    out = jax.block_until_ready(out)

    ref = _reference_forward(x, w1, b1, w2, b2)
    assert out.shape == (N, 1, H, W), out.shape
    # bf16 MXU operands => loosened tolerance vs the pure-f32 reference.
    max_err = float(jnp.max(jnp.abs(out - ref)))
    assert jnp.allclose(out, ref, atol=5e-2, rtol=5e-2), \
        f"mismatch vs reference: {max_err}"


if __name__ == "__main__":
    key = jax.random.PRNGKey(0)
    k1, k2 = jax.random.split(key)

    # Small, module-consistent shapes (hidden width stays 512 as in the module).
    # Case 1 exercises the MXU-classifier path (moderate C_in).
    _run_case(k1, N=2, C_in=128, H=16, W=16)
    # Case 2 exercises the VPU/XLU-classifier path (module default C_in=1024)
    # and the grid-step / tile-shrink logic.
    _run_case(k2, N=1, C_in=1024, H=16, W=16)

    print("KERNEL_OK")
</pallas_src>

<mosaic_0001>
module attributes {stable_mosaic.version = 11 : i64} {
  func.func @_disc_kernel(%arg0: i32, %arg1: i32, %arg2: memref<1x128x256xf32, #tpu.memory_space<vmem>>, %arg3: memref<512x128xbf16, #tpu.memory_space<vmem>>, %arg4: memref<512x1xf32, #tpu.memory_space<vmem>>, %arg5: memref<1x512xbf16, #tpu.memory_space<vmem>>, %arg6: memref<1xf32, #tpu.memory_space<smem>>, %arg7: memref<1x1x256xf32, #tpu.memory_space<vmem>>) attributes {dimension_semantics = [#tpu.dimension_semantics<parallel>, #tpu.dimension_semantics<parallel>], iteration_bounds = array<i64: 2, 1>, scalar_prefetch = 0 : i64, scratch_operands = 0 : i64, tpu.core_type = #tpu.core_type<tc>, window_params = [{transform_indices = @transform_0, window_bounds = array<i64: 1, 128, 256>}, {pipeline_mode = #tpu.pipeline_mode<synchronous>, transform_indices = @transform_1, window_bounds = array<i64: 512, 128>}, {pipeline_mode = #tpu.pipeline_mode<synchronous>, transform_indices = @transform_2, window_bounds = array<i64: 512, 1>}, {pipeline_mode = #tpu.pipeline_mode<synchronous>, transform_indices = @transform_3, window_bounds = array<i64: 1, 512>}, {transform_indices = @transform_4, window_bounds = array<i64: 1>}, {transform_indices = @transform_5, window_bounds = array<i64: 1, 1, 256>}]} {
    %c0 = arith.constant 0 : index
    %c0_0 = arith.constant 0 : index
    %c0_1 = arith.constant 0 : index
    %0 = vector.load %arg2[%c0, %c0_0, %c0_1] : memref<1x128x256xf32, #tpu.memory_space<vmem>>, vector<1x128x256xf32>
    %1 = vector.shape_cast %0 : vector<1x128x256xf32> to vector<128x256xf32>
    %2 = arith.truncf %1 : vector<128x256xf32> to vector<128x256xbf16>
    %c0_2 = arith.constant 0 : index
    %c0_3 = arith.constant 0 : index
    %3 = vector.load %arg3[%c0_2, %c0_3] : memref<512x128xbf16, #tpu.memory_space<vmem>>, vector<512x128xbf16>
    %cst = arith.constant dense<0.000000e+00> : vector<512x256xf32>
    %4 = tpu.matmul %3, %2, %cst {dimension_numbers = #tpu.dot_dimension_numbers<[1], [0], [0], [1], [0, 0, 1, 1], [], []>} : vector<512x128xbf16>, vector<128x256xbf16>, vector<512x256xf32> -> vector<512x256xf32>
    %c0_4 = arith.constant 0 : index
    %c0_5 = arith.constant 0 : index
    %5 = vector.load %arg4[%c0_4, %c0_5] : memref<512x1xf32, #tpu.memory_space<vmem>>, vector<512x1xf32>
    %6 = vector.broadcast %5 : vector<512x1xf32> to vector<512x256xf32>
    %7 = arith.addf %4, %6 : vector<512x256xf32>
    %cst_6 = arith.constant 2.000000e-01 : f32
    %8 = vector.broadcast %cst_6 : f32 to vector<512x256xf32>
    %9 = arith.mulf %8, %7 : vector<512x256xf32>
    %10 = arith.maximumf %7, %9 : vector<512x256xf32>
    %c0_7 = arith.constant 0 : index
    %c0_8 = arith.constant 0 : index
    %11 = vector.load %arg5[%c0_7, %c0_8] : memref<1x512xbf16, #tpu.memory_space<vmem>>, vector<1x512xbf16>
    %12 = arith.truncf %10 : vector<512x256xf32> to vector<512x256xbf16>
    %cst_9 = arith.constant dense<0.000000e+00> : vector<1x256xf32>
    %13 = tpu.matmul %11, %12, %cst_9 {dimension_numbers = #tpu.dot_dimension_numbers<[1], [0], [0], [1], [0, 0, 1, 1], [], []>} : vector<1x512xbf16>, vector<512x256xbf16>, vector<1x256xf32> -> vector<1x256xf32>
    %c0_10 = arith.constant 0 : index
    %14 = memref.load %arg6[%c0_10] : memref<1xf32, #tpu.memory_space<smem>>
    %15 = vector.broadcast %14 : f32 to vector<1x256xf32>
    %16 = arith.addf %13, %15 : vector<1x256xf32>
    %c0_11 = arith.constant 0 : index
    %c0_12 = arith.constant 0 : index
    %c0_13 = arith.constant 0 : index
    %17 = vector.load %arg7[%c0_11, %c0_12, %c0_13] : memref<1x1x256xf32, #tpu.memory_space<vmem>>, vector<1x1x256xf32>
    %18 = vector.shape_cast %17 : vector<1x1x256xf32> to vector<1x256xf32>
    %19 = vector.shape_cast %16 : vector<1x256xf32> to vector<1x1x256xf32>
    tpu.vector_store %arg7[%c0_11, %c0_12, %c0_13], %19 {strides = array<i32>} : memref<1x1x256xf32, #tpu.memory_space<vmem>>, vector<1x1x256xf32>,
    return
  }
  func.func @transform_0(%arg0: i32, %arg1: i32) -> (i32, i32, i32) {
    %c0_i32 = arith.constant 0 : i32
    %c0_i32_0 = arith.constant 0 : i32
    return %arg0, %c0_i32, %arg1 : i32, i32, i32
  }
  func.func @transform_1(%arg0: i32, %arg1: i32) -> (i32, i32) {
    %c0_i32 = arith.constant 0 : i32
    %c0_i32_0 = arith.constant 0 : i32
    %c0_i32_1 = arith.constant 0 : i32
    return %c0_i32, %c0_i32_0 : i32, i32
  }
  func.func @transform_2(%arg0: i32, %arg1: i32) -> (i32, i32) {
    %c0_i32 = arith.constant 0 : i32
    %c0_i32_0 = arith.constant 0 : i32
    %c0_i32_1 = arith.constant 0 : i32
    return %c0_i32, %c0_i32_0 : i32, i32
  }
  func.func @transform_3(%arg0: i32, %arg1: i32) -> (i32, i32) {
    %c0_i32 = arith.constant 0 : i32
    %c0_i32_0 = arith.constant 0 : i32
    %c0_i32_1 = arith.constant 0 : i32
    return %c0_i32, %c0_i32_0 : i32, i32
  }
  func.func @transform_4(%arg0: i32, %arg1: i32) -> i32 {
    %c0_i32 = arith.constant 0 : i32
    %c0_i32_0 = arith.constant 0 : i32
    return %c0_i32 : i32
  }
  func.func @transform_5(%arg0: i32, %arg1: i32) -> (i32, i32, i32) {
    %c0_i32 = arith.constant 0 : i32
    %c0_i32_0 = arith.constant 0 : i32
    return %arg0, %c0_i32, %arg1 : i32, i32, i32
  }
}

</mosaic_0001>

<llo_original>
// kernel: domain_discriminator_im_forward.1
$region0: #{domain_discriminator_im_forward.1}
  #allocation0 [shape = 'u32[]', space=smem, size = 0x4, offset = 0x4, fixed_abs, tag = 'smem constant byte address 0x4 - core index']
  #allocation1 [shape = 'u32[144,128]{1,0:T(1,128)}', space=vmem, size = 0x12000, scoped, tag = 'internal scratch']
  #allocation2 [shape = 'f32[1]{0:T(128)S(6)}', space=smem, size = 0x200, scoped, tag = 'scoped memory for domain_discriminator_im_forward.1']
  %s0 = inlined_call_operand.vmem [shape: f32[2,128,256], index: 0, kind: input, shape index: {}]
  %s1 = inlined_call_operand.vmem [shape: bf16[512,128], index: 1, kind: input, shape index: {}]
  %s2 = inlined_call_operand.vmem [shape: f32[512,1], index: 2, kind: input, shape index: {}]
  %s3 = inlined_call_operand.vmem [shape: bf16[1,512], index: 3, kind: input, shape index: {}]
  %s4 = inlined_call_operand.<no memory space> [shape: f32[1], index: 4, kind: input, shape index: {}]
  %s5 = inlined_call_operand.vmem [shape: f32[2,1,256], index: 5, kind: output, shape index: {}]
  %s6 = sld [smem:[#allocation0]]
  $region53: #{domain_discriminator_im_forward.1} parent=0
    _
  %s8 = ssub.s32 1, %s6
  %s9 = scalar_select 0, %s8, %s6
  %10 = sst [smem:[#allocation2]] %s4
  loop: start=0, step=1, limit=4
  $region2: #{domain_discriminator_im_forward.1} parent=0 // loop_pre_header
    _
  $region3: #{domain_discriminator_im_forward.1} parent=0 // loop_header
    %s12 = sphi 0, %s16
    %p13 = scmp.ge.s32.totalorder %s12, 4
    %s19 = sphi 0, %s31
    %s20 = sphi 0, %s27
    %s21 = sphi 0, %s19
    %s22 = sphi 0, %s20
    %s23 = sphi 0, %s21
    %s24 = sphi 0, %s22
    %s36 = sphi 0, %s38
    %s39 = sphi 0, %s36
    %s40 = sphi 0, %s39
    %s56 = sphi 0, %s40
    %s60 = sphi 0, %s60
    %s62 = sphi 0, %s60
    %s63 = sphi 0, %s62
    %s77 = sphi 0, %s63
    %s81 = sphi 0, %s81
    %s83 = sphi 0, %s81
    %s84 = sphi 0, %s83
    %s98 = sphi 0, %s84
    %s102 = sphi 0, %s102
    %s104 = sphi 0, %s102
    %s105 = sphi 0, %s104
    %s119 = sphi 0, %s105
    %s123 = sphi 0, %s123
    %s125 = sphi 0, %s123
    %s126 = sphi 0, %s125
    %s140 = sphi 0, %s126
    %s148 = sphi 0, %s150
    %s151 = sphi 0, %s148
    %s152 = sphi 0, %s151
    %s168 = sphi 0, %s152
  $region4: #{domain_discriminator_im_forward.1} parent=0 // loop_header_branch
    %15 = sbr.rel (%p13) target = $region8
  $region5: #{domain_discriminator_im_forward.1} parent=0 // loop_body
    %s17 = ssub.s32 %s12, 1
    %s18 = ssub.s32 %s12, 2
    %s25 = sadd.s32 1, %s20
    %p26 = scmp.ge.s32.totalorder %s25, 1
    %s27 = scalar_select %p26, 0, %s25
    %s28 = sadd.s32 1, %s19
    %s29 = scalar_select %p26, %s28, %s19
    %p30 = scmp.ge.s32.totalorder %s29, 2
    %s31 = scalar_select %p30, 0, %s29
    %s32 = ssub.s32 %s19, %s31
    %s33 = ssub.s32 %s20, %s27
    %s34 = sor.u32 %s32, %s33
    %p35 = scmp.eq.s32.totalorder %s34, 0
    %s37 = sadd.s32 %s36, 1
    %s38 = scalar_select %p35, %s36, %s37
    %p41 = pneg %p35
    %p42 = scmp.eq.s32.totalorder %s12, 1
    %p43 = por %p41, %p42
    %p44 = scmp.ne.s32.totalorder %s36, %s39
    %p45 = scmp.eq.s32.totalorder %s12, 0
    %p46 = por %p44, %p45
    %p47 = scmp.ne.s32.totalorder %s36, %s39
    %p48 = scmp.eq.s32.totalorder %s17, 1
    %p49 = por %p47, %p48
    %p50 = scmp.ne.s32.totalorder %s39, %s40
    %p51 = scmp.eq.s32.totalorder %s17, 0
    %p52 = por %p50, %p51
    %p53 = scmp.ne.s32.totalorder %s39, %s40
    %p54 = scmp.eq.s32.totalorder %s18, 1
    %p55 = por %p53, %p54
    %p57 = scmp.ne.s32.totalorder %s40, %s56
    %p58 = scmp.eq.s32.totalorder %s18, 0
    %p59 = por %p57, %p58
    %s61 = sadd.s32 %s60, 1
    %p64 = scmp.eq.s32.totalorder %s12, 1
    %p65 = scmp.ne.s32.totalorder %s60, %s62
    %p66 = scmp.eq.s32.totalorder %s12, 0
    %p67 = por %p65, %p66
    %p68 = scmp.ne.s32.totalorder %s60, %s62
    %p69 = scmp.eq.s32.totalorder %s17, 1
    %p70 = por %p68, %p69
    %p71 = scmp.ne.s32.totalorder %s62, %s63
    %p72 = scmp.eq.s32.totalorder %s17, 0
    %p73 = por %p71, %p72
    %p74 = scmp.ne.s32.totalorder %s62, %s63
    %p75 = scmp.eq.s32.totalorder %s18, 1
    %p76 = por %p74, %p75
    %p78 = scmp.ne.s32.totalorder %s63, %s77
    %p79 = scmp.eq.s32.totalorder %s18, 0
    %p80 = por %p78, %p79
    %s82 = sadd.s32 %s81, 1
    %p85 = scmp.eq.s32.totalorder %s12, 1
    %p86 = scmp.ne.s32.totalorder %s81, %s83
    %p87 = scmp.eq.s32.totalorder %s12, 0
    %p88 = por %p86, %p87
    %p89 = scmp.ne.s32.totalorder %s81, %s83
    %p90 = scmp.eq.s32.totalorder %s17, 1
    %p91 = por %p89, %p90
    %p92 = scmp.ne.s32.totalorder %s83, %s84
    %p93 = scmp.eq.s32.totalorder %s17, 0
    %p94 = por %p92, %p93
    %p95 = scmp.ne.s32.totalorder %s83, %s84
    %p96 = scmp.eq.s32.totalorder %s18, 1
    %p97 = por %p95, %p96
    %p99 = scmp.ne.s32.totalorder %s84, %s98
    %p100 = scmp.eq.s32.totalorder %s18, 0
    %p101 = por %p99, %p100
    %s103 = sadd.s32 %s102, 1
    %p106 = scmp.eq.s32.totalorder %s12, 1
    %p107 = scmp.ne.s32.totalorder %s102, %s104
    %p108 = scmp.eq.s32.totalorder %s12, 0
    %p109 = por %p107, %p108
    %p110 = scmp.ne.s32.totalorder %s102, %s104
    %p111 = scmp.eq.s32.totalorder %s17, 1
    %p112 = por %p110, %p111
    %p113 = scmp.ne.s32.totalorder %s104, %s105
    %p114 = scmp.eq.s32.totalorder %s17, 0
    %p115 = por %p113, %p114
    %p116 = scmp.ne.s32.totalorder %s104, %s105
    %p117 = scmp.eq.s32.totalorder %s18, 1
    %p118 = por %p116, %p117
    %p120 = scmp.ne.s32.totalorder %s105, %s119
    %p121 = scmp.eq.s32.totalorder %s18, 0
    %p122 = por %p120, %p121
    %s124 = sadd.s32 %s123, 1
    %p127 = scmp.eq.s32.totalorder %s12, 1
    %p128 = scmp.ne.s32.totalorder %s123, %s125
    %p129 = scmp.eq.s32.totalorder %s12, 0
    %p130 = por %p128, %p129
    %p131 = scmp.ne.s32.totalorder %s123, %s125
    %p132 = scmp.eq.s32.totalorder %s17, 1
    %p133 = por %p131, %p132
    %p134 = scmp.ne.s32.totalorder %s125, %s126
    %p135 = scmp.eq.s32.totalorder %s17, 0
    %p136 = por %p134, %p135
    %p137 = scmp.ne.s32.totalorder %s125, %s126
    %p138 = scmp.eq.s32.totalorder %s18, 1
    %p139 = por %p137, %p138
    %p141 = scmp.ne.s32.totalorder %s126, %s140
    %p142 = scmp.eq.s32.totalorder %s18, 0
    %p143 = por %p141, %p142
    %s144 = ssub.s32 %s19, %s31
    %s145 = ssub.s32 %s20, %s27
    %s146 = sor.u32 %s144, %s145
    %p147 = scmp.eq.s32.totalorder %s146, 0
    %s149 = sadd.s32 %s148, 1
    %s150 = scalar_select %p147, %s148, %s149
    %p153 = pneg %p147
    %p154 = scmp.eq.s32.totalorder %s12, 1
    %p155 = por %p153, %p154
    %p156 = scmp.ne.s32.totalorder %s148, %s151
    %p157 = scmp.eq.s32.totalorder %s12, 0
    %p158 = por %p156, %p157
    %p159 = scmp.ne.s32.totalorder %s148, %s151
    %p160 = scmp.eq.s32.totalorder %s17, 1
    %p161 = por %p159, %p160
    %p162 = scmp.ne.s32.totalorder %s151, %s152
    %p163 = scmp.eq.s32.totalorder %s17, 0
    %p164 = por %p162, %p163
    %p165 = scmp.ne.s32.totalorder %s151, %s152
    %p166 = scmp.eq.s32.totalorder %s18, 1
    %p167 = por %p165, %p166
    %p169 = scmp.ne.s32.totalorder %s152, %s168
    %p170 = scmp.eq.s32.totalorder %s18, 0
    %p171 = por %p169, %p170
    %p172 = scmp.le.s32.totalorder 1, %s12
    %p173 = scmp.lt.s32.totalorder %s12, 3
    %p174 = pnand %p172, %p173
    %p175 = pneg %p174
    // Predicated region
    $region9: #{domain_discriminator_im_forward.1} parent=5 // pred_check
      _
    $region10: #{domain_discriminator_im_forward.1} parent=5 // pred_check_branch
      %177 = sbr.rel (%p174) target = $region12
    $region11: #{domain_discriminator_im_forward.1} parent=5 // pred_region
      %s178 = ssub.s32 %s12, 1
      // Predicated region
      $region13: #{domain_discriminator_im_forward.1} parent=11 // pred_check
        %p179 = pneg %p73
      $region14: #{domain_discriminator_im_forward.1} parent=11 // pred_check_branch
        %181 = sbr.rel (%p179) target = $region16
      $region15: #{domain_discriminator_im_forward.1} parent=11 // pred_region
        _
      $region16: #{domain_discriminator_im_forward.1} parent=11 // pred_fallthru
        _
      // Predicated region
      $region17: #{domain_discriminator_im_forward.1} parent=11 // pred_check
        %p182 = pneg %p94
      $region18: #{domain_discriminator_im_forward.1} parent=11 // pred_check_branch
        %184 = sbr.rel (%p182) target = $region20
      $region19: #{domain_discriminator_im_forward.1} parent=11 // pred_region
        _
      $region20: #{domain_discriminator_im_forward.1} parent=11 // pred_fallthru
        _
      // Predicated region
      $region21: #{domain_discriminator_im_forward.1} parent=11 // pred_check
        %p185 = pneg %p115
      $region22: #{domain_discriminator_im_forward.1} parent=11 // pred_check_branch
        %187 = sbr.rel (%p185) target = $region24
      $region23: #{domain_discriminator_im_forward.1} parent=11 // pred_region
        _
      $region24: #{domain_discriminator_im_forward.1} parent=11 // pred_fallthru
        _
      // Predicated region
      $region25: #{domain_discriminator_im_forward.1} parent=11 // pred_check
        %p188 = pneg %p136
      $region26: #{domain_discriminator_im_forward.1} parent=11 // pred_check_branch
        %190 = sbr.rel (%p188) target = $region28
      $region27: #{domain_discriminator_im_forward.1} parent=11 // pred_region
        _
      $region28: #{domain_discriminator_im_forward.1} parent=11 // pred_fallthru
        _
    $region12: #{domain_discriminator_im_forward.1} parent=5 // pred_fallthru
      _
    %p191 = scmp.lt.s32.totalorder %s12, 2
    // Predicated region
    $region29: #{domain_discriminator_im_forward.1} parent=5 // pred_check
      %p192 = pneg %p191
    $region30: #{domain_discriminator_im_forward.1} parent=5 // pred_check_branch
      %194 = sbr.rel (%p192) target = $region32
    $region31: #{domain_discriminator_im_forward.1} parent=5 // pred_region
      // Predicated region
      $region33: #{domain_discriminator_im_forward.1} parent=31 // pred_check
        %p195 = pneg %p46
      $region34: #{domain_discriminator_im_forward.1} parent=31 // pred_check_branch
        %197 = sbr.rel (%p195) target = $region36
      $region35: #{domain_discriminator_im_forward.1} parent=31 // pred_region
        %s198 = smul.u32 2, %s20
        %p199 = scmp.lt.s32.totalorder %s19, 1
        %s200 = scalar_select %p199, %s19, 1
        %p201 = scmp.lt.s32.totalorder %s198, 1
        %s202 = scalar_select %p201, %s198, 1
        %s203 = smul.addr %s200, 32
        %s204 = sadd.s32 %s202, %s203
        %s205 = smul.addr %s204, 8
        %s206 = scalar_lea.vmem %s0, %s205
        %s207 = smul.u32 2, %s20
      $region36: #{domain_discriminator_im_forward.1} parent=31 // pred_fallthru
        _
    $region32: #{domain_discriminator_im_forward.1} parent=5 // pred_fallthru
      _
    %p208 = scmp.le.s32.totalorder 1, %s12
    %p209 = scmp.lt.s32.totalorder %s12, 3
    %p210 = pnand %p208, %p209
    %p211 = pneg %p210
    // Predicated region
    $region37: #{domain_discriminator_im_forward.1} parent=5 // pred_check
      _
    $region38: #{domain_discriminator_im_forward.1} parent=5 // pred_check_branch
      %213 = sbr.rel (%p210) target = $region40
    $region39: #{domain_discriminator_im_forward.1} parent=5 // pred_region
      %s214 = ssub.s32 %s12, 1
      %s215 = smul.u32 2, %s22
      %p216 = scmp.lt.s32.totalorder %s21, 1
      %s217 = scalar_select %p216, %s21, 1
      %p218 = scmp.lt.s32.totalorder %s215, 1
      %s219 = scalar_select %p218, %s215, 1
      %s220 = smul.addr %s217, 32
      %s221 = sadd.s32 %s219, %s220
      %s222 = smul.addr %s221, 8
      %s223 = scalar_lea.vmem %s0, %s222
      %p224 = pneg %p52
      %p225 = pneg %p49
      %p226 = pneg %p73
      %p227 = pneg %p70
      %p228 = pneg %p94
      %p229 = pneg %p91
      %p230 = pneg %p115
      %p231 = pneg %p112
      %p232 = pneg %p136
      %p233 = pneg %p133
      %p234 = pneg %p164
      %p235 = pneg %p161
      %s236 = smul.u32 2, %s22
      %p237 = scmp.lt.s32.totalorder %s21, 1
      %s238 = scalar_select %p237, %s21, 1
      %p239 = scmp.lt.s32.totalorder %s236, 1
      %s240 = scalar_select %p239, %s236, 1
      %s241 = smul.addr %s238, 2
      %s242 = sadd.s32 %s240, %s241
      %s243 = scalar_lea.vmem %s5, %s242
      %s244 = smul.u32 2, %s22
      %p245 = scmp.lt.s32.totalorder %s21, 1
      %s246 = scalar_select %p245, %s21, 1
      %p247 = scmp.lt.s32.totalorder %s244, 1
      %s248 = scalar_select %p247, %s244, 1
      %s249 = smul.addr %s246, 32
      %s250 = sadd.s32 %s248, %s249
      %s251 = smul.addr %s250, 8
      %s252 = scalar_lea.vmem %s0, %s251
      %s253 = smul.u32 2, %s22
      %s254 = smul.u32 2, %s22
      %p255 = scmp.lt.s32.totalorder %s21, 1
      %s256 = scalar_select %p255, %s21, 1
      %p257 = scmp.lt.s32.totalorder %s254, 1
      %s258 = scalar_select %p257, %s254, 1
      %s259 = smul.addr %s256, 2
      %s260 = sadd.s32 %s258, %s259
      %s261 = scalar_lea.vmem %s5, %s260
      %s262 = smul.u32 2, %s22
      %v264 = vld [vmem:[%s252] sm:$0xff]
      %v265 = vld [vmem:[%s252 + $0x8] sm:$0xff]
      %v266 = vld [vmem:[%s252 + $0x10] sm:$0xff]
      %v267 = vld [vmem:[%s252 + $0x18] sm:$0xff]
      %v268 = vld [vmem:[%s252 + $0x20] sm:$0xff]
      %v269 = vld [vmem:[%s252 + $0x28] sm:$0xff]
      %v270 = vld [vmem:[%s252 + $0x30] sm:$0xff]
      %v271 = vld [vmem:[%s252 + $0x38] sm:$0xff]
      %v272 = vld [vmem:[%s252 + $0x40] sm:$0xff]
      %v273 = vld [vmem:[%s252 + $0x48] sm:$0xff]
      %v274 = vld [vmem:[%s252 + $0x50] sm:$0xff]
      %v275 = vld [vmem:[%s252 + $0x58] sm:$0xff]
      %v276 = vld [vmem:[%s252 + $0x60] sm:$0xff]
      %v277 = vld [vmem:[%s252 + $0x68] sm:$0xff]
      %v278 = vld [vmem:[%s252 + $0x70] sm:$0xff]
      %v279 = vld [vmem:[%s252 + $0x78] sm:$0xff]
      %v280 = vld [vmem:[%s252 + $0x80] sm:$0xff]
      %v281 = vld [vmem:[%s252 + $0x88] sm:$0xff]
      %v282 = vld [vmem:[%s252 + $0x90] sm:$0xff]
      %v283 = vld [vmem:[%s252 + $0x98] sm:$0xff]
      %v284 = vld [vmem:[%s252 + $0xa0] sm:$0xff]
      %v285 = vld [vmem:[%s252 + $0xa8] sm:$0xff]
      %v286 = vld [vmem:[%s252 + $0xb0] sm:$0xff]
      %v287 = vld [vmem:[%s252 + $0xb8] sm:$0xff]
      %v288 = vld [vmem:[%s252 + $0xc0] sm:$0xff]
      %v289 = vld [vmem:[%s252 + $0xc8] sm:$0xff]
      %v290 = vld [vmem:[%s252 + $0xd0] sm:$0xff]
      %v291 = vld [vmem:[%s252 + $0xd8] sm:$0xff]
      %v292 = vld [vmem:[%s252 + $0xe0] sm:$0xff]
      %v293 = vld [vmem:[%s252 + $0xe8] sm:$0xff]
      %v294 = vld [vmem:[%s252 + $0xf0] sm:$0xff]
      %v295 = vld [vmem:[%s252 + $0xf8] sm:$0xff]
      %v296 = vpack.c.bf16 %v266, %v264
      %v297 = vpack.c.bf16 %v267, %v265
      %v298 = vpack.c.bf16 %v270, %v268
      %v299 = vpack.c.bf16 %v271, %v269
      %v300 = vpack.c.bf16 %v274, %v272
      %v301 = vpack.c.bf16 %v275, %v273
      %v302 = vpack.c.bf16 %v278, %v276
      %v303 = vpack.c.bf16 %v279, %v277
      %v304 = vpack.c.bf16 %v282, %v280
      %v305 = vpack.c.bf16 %v283, %v281
      %v306 = vpack.c.bf16 %v286, %v284
      %v307 = vpack.c.bf16 %v287, %v285
      %v308 = vpack.c.bf16 %v290, %v288
      %v309 = vpack.c.bf16 %v291, %v289
      %v310 = vpack.c.bf16 %v294, %v292
      %v311 = vpack.c.bf16 %v295, %v293
      %v312 = vld [vmem:[%s1] sm:$0xf]
      %v313 = vld [vmem:[%s1 + $0x4] sm:$0xf]
      %v314 = vld [vmem:[%s1 + $0x8] sm:$0xf]
      %v315 = vld [vmem:[%s1 + $0xc] sm:$0xf]
      %v316 = vld [vmem:[%s1 + $0x10] sm:$0xf]
      %v317 = vld [vmem:[%s1 + $0x14] sm:$0xf]
      %v318 = vld [vmem:[%s1 + $0x18] sm:$0xf]
      %v319 = vld [vmem:[%s1 + $0x1c] sm:$0xf]
      %v320 = vld [vmem:[%s1 + $0x20] sm:$0xf]
      %v321 = vld [vmem:[%s1 + $0x24] sm:$0xf]
      %v322 = vld [vmem:[%s1 + $0x28] sm:$0xf]
      %v323 = vld [vmem:[%s1 + $0x2c] sm:$0xf]
      %v324 = vld [vmem:[%s1 + $0x30] sm:$0xf]
      %v325 = vld [vmem:[%s1 + $0x34] sm:$0xf]
      %v326 = vld [vmem:[%s1 + $0x38] sm:$0xf]
      %v327 = vld [vmem:[%s1 + $0x3c] sm:$0xf]
      %v328 = vld [vmem:[%s1 + $0x40] sm:$0xf]
      %v329 = vld [vmem:[%s1 + $0x44] sm:$0xf]
      %v330 = vld [vmem:[%s1 + $0x48] sm:$0xf]
      %v331 = vld [vmem:[%s1 + $0x4c] sm:$0xf]
      %v332 = vld [vmem:[%s1 + $0x50] sm:$0xf]
      %v333 = vld [vmem:[%s1 + $0x54] sm:$0xf]
      %v334 = vld [vmem:[%s1 + $0x58] sm:$0xf]
      %v335 = vld [vmem:[%s1 + $0x5c] sm:$0xf]
      %v336 = vld [vmem:[%s1 + $0x60] sm:$0xf]
      %v337 = vld [vmem:[%s1 + $0x64] sm:$0xf]
      %v338 = vld [vmem:[%s1 + $0x68] sm:$0xf]
      %v339 = vld [vmem:[%s1 + $0x6c] sm:$0xf]
      %v340 = vld [vmem:[%s1 + $0x70] sm:$0xf]
      %v341 = vld [vmem:[%s1 + $0x74] sm:$0xf]
      %v342 = vld [vmem:[%s1 + $0x78] sm:$0xf]
      %v343 = vld [vmem:[%s1 + $0x7c] sm:$0xf]
      %v344 = vld [vmem:[%s1 + $0x80] sm:$0xf]
      %v345 = vld [vmem:[%s1 + $0x84] sm:$0xf]
      %v346 = vld [vmem:[%s1 + $0x88] sm:$0xf]
      %v347 = vld [vmem:[%s1 + $0x8c] sm:$0xf]
      %v348 = vld [vmem:[%s1 + $0x90] sm:$0xf]
      %v349 = vld [vmem:[%s1 + $0x94] sm:$0xf]
      %v350 = vld [vmem:[%s1 + $0x98] sm:$0xf]
      %v351 = vld [vmem:[%s1 + $0x9c] sm:$0xf]
      %v352 = vld [vmem:[%s1 + $0xa0] sm:$0xf]
      %v353 = vld [vmem:[%s1 + $0xa4] sm:$0xf]
      %v354 = vld [vmem:[%s1 + $0xa8] sm:$0xf]
      %v355 = vld [vmem:[%s1 + $0xac] sm:$0xf]
      %v356 = vld [vmem:[%s1 + $0xb0] sm:$0xf]
      %v357 = vld [vmem:[%s1 + $0xb4] sm:$0xf]
      %v358 = vld [vmem:[%s1 + $0xb8] sm:$0xf]
      %v359 = vld [vmem:[%s1 + $0xbc] sm:$0xf]
      %v360 = vld [vmem:[%s1 + $0xc0] sm:$0xf]
      %v361 = vld [vmem:[%s1 + $0xc4] sm:$0xf]
      %v362 = vld [vmem:[%s1 + $0xc8] sm:$0xf]
      %v363 = vld [vmem:[%s1 + $0xcc] sm:$0xf]
      %v364 = vld [vmem:[%s1 + $0xd0] sm:$0xf]
      %v365 = vld [vmem:[%s1 + $0xd4] sm:$0xf]
      %v366 = vld [vmem:[%s1 + $0xd8] sm:$0xf]
      %v367 = vld [vmem:[%s1 + $0xdc] sm:$0xf]
      %v368 = vld [vmem:[%s1 + $0xe0] sm:$0xf]
      %v369 = vld [vmem:[%s1 + $0xe4] sm:$0xf]
      %v370 = vld [vmem:[%s1 + $0xe8] sm:$0xf]
      %v371 = vld [vmem:[%s1 + $0xec] sm:$0xf]
      %v372 = vld [vmem:[%s1 + $0xf0] sm:$0xf]
      %v373 = vld [vmem:[%s1 + $0xf4] sm:$0xf]
      %v374 = vld [vmem:[%s1 + $0xf8] sm:$0xf]
      %v375 = vld [vmem:[%s1 + $0xfc] sm:$0xf]
      %v376 = vld [vmem:[%s2] sm:$0xff]
      %v377 = vld [vmem:[%s2 + $0x8] sm:$0xff]
      %v378 = vld [vmem:[%s2 + $0x10] sm:$0xff]
      %v379 = vld [vmem:[%s2 + $0x18] sm:$0xff]
      %v380 = vld [vmem:[%s2 + $0x20] sm:$0xff]
      %v381 = vld [vmem:[%s2 + $0x28] sm:$0xff]
      %v382 = vld [vmem:[%s2 + $0x30] sm:$0xff]
      %v383 = vld [vmem:[%s2 + $0x38] sm:$0xff]
      %v384 = vld [vmem:[%s2 + $0x40] sm:$0xff]
      %v385 = vld [vmem:[%s2 + $0x48] sm:$0xff]
      %v386 = vld [vmem:[%s2 + $0x50] sm:$0xff]
      %v387 = vld [vmem:[%s2 + $0x58] sm:$0xff]
      %v388 = vld [vmem:[%s2 + $0x60] sm:$0xff]
      %v389 = vld [vmem:[%s2 + $0x68] sm:$0xff]
      %v390 = vld [vmem:[%s2 + $0x70] sm:$0xff]
      %v391 = vld [vmem:[%s2 + $0x78] sm:$0xff]
      %v392 = vld [vmem:[%s2 + $0x80] sm:$0xff]
      %v393 = vld [vmem:[%s2 + $0x88] sm:$0xff]
      %v394 = vld [vmem:[%s2 + $0x90] sm:$0xff]
      %v395 = vld [vmem:[%s2 + $0x98] sm:$0xff]
      %v396 = vld [vmem:[%s2 + $0xa0] sm:$0xff]
      %v397 = vld [vmem:[%s2 + $0xa8] sm:$0xff]
      %v398 = vld [vmem:[%s2 + $0xb0] sm:$0xff]
      %v399 = vld [vmem:[%s2 + $0xb8] sm:$0xff]
      %v400 = vld [vmem:[%s2 + $0xc0] sm:$0xff]
      %v401 = vld [vmem:[%s2 + $0xc8] sm:$0xff]
      %v402 = vld [vmem:[%s2 + $0xd0] sm:$0xff]
      %v403 = vld [vmem:[%s2 + $0xd8] sm:$0xff]
      %v404 = vld [vmem:[%s2 + $0xe0] sm:$0xff]
      %v405 = vld [vmem:[%s2 + $0xe8] sm:$0xff]
      %v406 = vld [vmem:[%s2 + $0xf0] sm:$0xff]
      %v407 = vld [vmem:[%s2 + $0xf8] sm:$0xff]
      %v408 = vld [vmem:[%s2 + $0x100] sm:$0xff]
      %v409 = vld [vmem:[%s2 + $0x108] sm:$0xff]
      %v410 = vld [vmem:[%s2 + $0x110] sm:$0xff]
      %v411 = vld [vmem:[%s2 + $0x118] sm:$0xff]
      %v412 = vld [vmem:[%s2 + $0x120] sm:$0xff]
      %v413 = vld [vmem:[%s2 + $0x128] sm:$0xff]
      %v414 = vld [vmem:[%s2 + $0x130] sm:$0xff]
      %v415 = vld [vmem:[%s2 + $0x138] sm:$0xff]
      %v416 = vld [vmem:[%s2 + $0x140] sm:$0xff]
      %v417 = vld [vmem:[%s2 + $0x148] sm:$0xff]
      %v418 = vld [vmem:[%s2 + $0x150] sm:$0xff]
      %v419 = vld [vmem:[%s2 + $0x158] sm:$0xff]
      %v420 = vld [vmem:[%s2 + $0x160] sm:$0xff]
      %v421 = vld [vmem:[%s2 + $0x168] sm:$0xff]
      %v422 = vld [vmem:[%s2 + $0x170] sm:$0xff]
      %v423 = vld [vmem:[%s2 + $0x178] sm:$0xff]
      %v424 = vld [vmem:[%s2 + $0x180] sm:$0xff]
      %v425 = vld [vmem:[%s2 + $0x188] sm:$0xff]
      %v426 = vld [vmem:[%s2 + $0x190] sm:$0xff]
      %v427 = vld [vmem:[%s2 + $0x198] sm:$0xff]
      %v428 = vld [vmem:[%s2 + $0x1a0] sm:$0xff]
      %v429 = vld [vmem:[%s2 + $0x1a8] sm:$0xff]
      %v430 = vld [vmem:[%s2 + $0x1b0] sm:$0xff]
      %v431 = vld [vmem:[%s2 + $0x1b8] sm:$0xff]
      %v432 = vld [vmem:[%s2 + $0x1c0] sm:$0xff]
      %v433 = vld [vmem:[%s2 + $0x1c8] sm:$0xff]
      %v434 = vld [vmem:[%s2 + $0x1d0] sm:$0xff]
      %v435 = vld [vmem:[%s2 + $0x1d8] sm:$0xff]
      %v436 = vld [vmem:[%s2 + $0x1e0] sm:$0xff]
      %v437 = vld [vmem:[%s2 + $0x1e8] sm:$0xff]
      %v438 = vld [vmem:[%s2 + $0x1f0] sm:$0xff]
      %v439 = vld [vmem:[%s2 + $0x1f8] sm:$0xff]
      %441 = vset.pattern.permute.xlu0 0
      %442 = vperm.xlu0 %441, %v376
      %v443 = vpop.permute.xlu0 %442
      %446 = vset.pattern.permute.xlu0 0
      %447 = vperm.xlu0 %446, %v377
      %v448 = vpop.permute.xlu0 %447
      %451 = vset.pattern.permute.xlu0 0
      %452 = vperm.xlu0 %451, %v378
      %v453 = vpop.permute.xlu0 %452
      %456 = vset.pattern.permute.xlu0 0
      %457 = vperm.xlu0 %456, %v379
      %v458 = vpop.permute.xlu0 %457
      %461 = vset.pattern.permute.xlu0 0
      %462 = vperm.xlu0 %461, %v380
      %v463 = vpop.permute.xlu0 %462
      %466 = vset.pattern.permute.xlu0 0
      %467 = vperm.xlu0 %466, %v381
      %v468 = vpop.permute.xlu0 %467
      %471 = vset.pattern.permute.xlu0 0
      %472 = vperm.xlu0 %471, %v382
      %v473 = vpop.permute.xlu0 %472
      %476 = vset.pattern.permute.xlu0 0
      %477 = vperm.xlu0 %476, %v383
      %v478 = vpop.permute.xlu0 %477
      %481 = vset.pattern.permute.xlu0 0
      %482 = vperm.xlu0 %481, %v384
      %v483 = vpop.permute.xlu0 %482
      %486 = vset.pattern.permute.xlu0 0
      %487 = vperm.xlu0 %486, %v385
      %v488 = vpop.permute.xlu0 %487
      %491 = vset.pattern.permute.xlu0 0
      %492 = vperm.xlu0 %491, %v386
      %v493 = vpop.permute.xlu0 %492
      %496 = vset.pattern.permute.xlu0 0
      %497 = vperm.xlu0 %496, %v387
      %v498 = vpop.permute.xlu0 %497
      %501 = vset.pattern.permute.xlu0 0
      %502 = vperm.xlu0 %501, %v388
      %v503 = vpop.permute.xlu0 %502
      %506 = vset.pattern.permute.xlu0 0
      %507 = vperm.xlu0 %506, %v389
      %v508 = vpop.permute.xlu0 %507
      %511 = vset.pattern.permute.xlu0 0
      %512 = vperm.xlu0 %511, %v390
      %v513 = vpop.permute.xlu0 %512
      %516 = vset.pattern.permute.xlu0 0
      %517 = vperm.xlu0 %516, %v391
      %v518 = vpop.permute.xlu0 %517
      %521 = vset.pattern.permute.xlu0 0
      %522 = vperm.xlu0 %521, %v392
      %v523 = vpop.permute.xlu0 %522
      %526 = vset.pattern.permute.xlu0 0
      %527 = vperm.xlu0 %526, %v393
      %v528 = vpop.permute.xlu0 %527
      %531 = vset.pattern.permute.xlu0 0
      %532 = vperm.xlu0 %531, %v394
      %v533 = vpop.permute.xlu0 %532
      %536 = vset.pattern.permute.xlu0 0
      %537 = vperm.xlu0 %536, %v395
      %v538 = vpop.permute.xlu0 %537
      %541 = vset.pattern.permute.xlu0 0
      %542 = vperm.xlu0 %541, %v396
      %v543 = vpop.permute.xlu0 %542
      %546 = vset.pattern.permute.xlu0 0
      %547 = vperm.xlu0 %546, %v397
      %v548 = vpop.permute.xlu0 %547
      %551 = vset.pattern.permute.xlu0 0
      %552 = vperm.xlu0 %551, %v398
      %v553 = vpop.permute.xlu0 %552
      %556 = vset.pattern.permute.xlu0 0
      %557 = vperm.xlu0 %556, %v399
      %v558 = vpop.permute.xlu0 %557
      %561 = vset.pattern.permute.xlu0 0
      %562 = vperm.xlu0 %561, %v400
      %v563 = vpop.permute.xlu0 %562
      %566 = vset.pattern.permute.xlu0 0
      %567 = vperm.xlu0 %566, %v401
      %v568 = vpop.permute.xlu0 %567
      %571 = vset.pattern.permute.xlu0 0
      %572 = vperm.xlu0 %571, %v402
      %v573 = vpop.permute.xlu0 %572
      %576 = vset.pattern.permute.xlu0 0
      %577 = vperm.xlu0 %576, %v403
      %v578 = vpop.permute.xlu0 %577
      %581 = vset.pattern.permute.xlu0 0
      %582 = vperm.xlu0 %581, %v404
      %v583 = vpop.permute.xlu0 %582
      %586 = vset.pattern.permute.xlu0 0
      %587 = vperm.xlu0 %586, %v405
      %v588 = vpop.permute.xlu0 %587
      %591 = vset.pattern.permute.xlu0 0
      %592 = vperm.xlu0 %591, %v406
      %v593 = vpop.permute.xlu0 %592
      %596 = vset.pattern.permute.xlu0 0
      %597 = vperm.xlu0 %596, %v407
      %v598 = vpop.permute.xlu0 %597
      %601 = vset.pattern.permute.xlu0 0
      %602 = vperm.xlu0 %601, %v408
      %v603 = vpop.permute.xlu0 %602
      %606 = vset.pattern.permute.xlu0 0
      %607 = vperm.xlu0 %606, %v409
      %v608 = vpop.permute.xlu0 %607
      %611 = vset.pattern.permute.xlu0 0
      %612 = vperm.xlu0 %611, %v410
      %v613 = vpop.permute.xlu0 %612
      %616 = vset.pattern.permute.xlu0 0
      %617 = vperm.xlu0 %616, %v411
      %v618 = vpop.permute.xlu0 %617
      %621 = vset.pattern.permute.xlu0 0
      %622 = vperm.xlu0 %621, %v412
      %v623 = vpop.permute.xlu0 %622
      %626 = vset.pattern.permute.xlu0 0
      %627 = vperm.xlu0 %626, %v413
      %v628 = vpop.permute.xlu0 %627
      %631 = vset.pattern.permute.xlu0 0
      %632 = vperm.xlu0 %631, %v414
      %v633 = vpop.permute.xlu0 %632
      %636 = vset.pattern.permute.xlu0 0
      %637 = vperm.xlu0 %636, %v415
      %v638 = vpop.permute.xlu0 %637
      %641 = vset.pattern.permute.xlu0 0
      %642 = vperm.xlu0 %641, %v416
      %v643 = vpop.permute.xlu0 %642
      %646 = vset.pattern.permute.xlu0 0
      %647 = vperm.xlu0 %646, %v417
      %v648 = vpop.permute.xlu0 %647
      %651 = vset.pattern.permute.xlu0 0
      %652 = vperm.xlu0 %651, %v418
      %v653 = vpop.permute.xlu0 %652
      %656 = vset.pattern.permute.xlu0 0
      %657 = vperm.xlu0 %656, %v419
      %v658 = vpop.permute.xlu0 %657
      %661 = vset.pattern.permute.xlu0 0
      %662 = vperm.xlu0 %661, %v420
      %v663 = vpop.permute.xlu0 %662
      %666 = vset.pattern.permute.xlu0 0
      %667 = vperm.xlu0 %666, %v421
      %v668 = vpop.permute.xlu0 %667
      %671 = vset.pattern.permute.xlu0 0
      %672 = vperm.xlu0 %671, %v422
      %v673 = vpop.permute.xlu0 %672
      %676 = vset.pattern.permute.xlu0 0
      %677 = vperm.xlu0 %676, %v423
      %v678 = vpop.permute.xlu0 %677
      %681 = vset.pattern.permute.xlu0 0
      %682 = vperm.xlu0 %681, %v424
      %v683 = vpop.permute.xlu0 %682
      %686 = vset.pattern.permute.xlu0 0
      %687 = vperm.xlu0 %686, %v425
      %v688 = vpop.permute.xlu0 %687
      %691 = vset.pattern.permute.xlu0 0
      %692 = vperm.xlu0 %691, %v426
      %v693 = vpop.permute.xlu0 %692
      %696 = vset.pattern.permute.xlu0 0
      %697 = vperm.xlu0 %696, %v427
      %v698 = vpop.permute.xlu0 %697
      %701 = vset.pattern.permute.xlu0 0
      %702 = vperm.xlu0 %701, %v428
      %v703 = vpop.permute.xlu0 %702
      %706 = vset.pattern.permute.xlu0 0
      %707 = vperm.xlu0 %706, %v429
      %v708 = vpop.permute.xlu0 %707
      %711 = vset.pattern.permute.xlu0 0
      %712 = vperm.xlu0 %711, %v430
      %v713 = vpop.permute.xlu0 %712
      %716 = vset.pattern.permute.xlu0 0
      %717 = vperm.xlu0 %716, %v431
      %v718 = vpop.permute.xlu0 %717
      %721 = vset.pattern.permute.xlu0 0
      %722 = vperm.xlu0 %721, %v432
      %v723 = vpop.permute.xlu0 %722
      %726 = vset.pattern.permute.xlu0 0
      %727 = vperm.xlu0 %726, %v433
      %v728 = vpop.permute.xlu0 %727
      %731 = vset.pattern.permute.xlu0 0
      %732 = vperm.xlu0 %731, %v434
      %v733 = vpop.permute.xlu0 %732
      %736 = vset.pattern.permute.xlu0 0
      %737 = vperm.xlu0 %736, %v435
      %v738 = vpop.permute.xlu0 %737
      %741 = vset.pattern.permute.xlu0 0
      %742 = vperm.xlu0 %741, %v436
      %v743 = vpop.permute.xlu0 %742
      %746 = vset.pattern.permute.xlu0 0
      %747 = vperm.xlu0 %746, %v437
      %v748 = vpop.permute.xlu0 %747
      %751 = vset.pattern.permute.xlu0 0
      %752 = vperm.xlu0 %751, %v438
      %v753 = vpop.permute.xlu0 %752
      %756 = vset.pattern.permute.xlu0 0
      %757 = vperm.xlu0 %756, %v439
      %v758 = vpop.permute.xlu0 %757
      %v824 = vunpack.c.l.b16 %v312
      %v825 = vunpack.c.l.b16 %v313
      %v826 = vunpack.c.l.b16 %v314
      %v827 = vunpack.c.l.b16 %v315
      %v828 = vunpack.c.l.b16 %v316
      %v829 = vunpack.c.l.b16 %v317
      %v830 = vunpack.c.l.b16 %v318
      %v831 = vunpack.c.l.b16 %v319
      %v832 = vunpack.c.l.b16 %v320
      %v833 = vunpack.c.l.b16 %v321
      %v834 = vunpack.c.l.b16 %v322
      %v835 = vunpack.c.l.b16 %v323
      %v836 = vunpack.c.l.b16 %v324
      %v837 = vunpack.c.l.b16 %v325
      %v838 = vunpack.c.l.b16 %v326
      %v839 = vunpack.c.l.b16 %v327
      %v840 = vunpack.c.l.b16 %v328
      %v841 = vunpack.c.l.b16 %v329
      %v842 = vunpack.c.l.b16 %v330
      %v843 = vunpack.c.l.b16 %v331
      %v844 = vunpack.c.l.b16 %v332
      %v845 = vunpack.c.l.b16 %v333
      %v846 = vunpack.c.l.b16 %v334
      %v847 = vunpack.c.l.b16 %v335
      %v848 = vunpack.c.l.b16 %v336
      %v849 = vunpack.c.l.b16 %v337
      %v850 = vunpack.c.l.b16 %v338
      %v851 = vunpack.c.l.b16 %v339
      %v852 = vunpack.c.l.b16 %v340
      %v853 = vunpack.c.l.b16 %v341
      %v854 = vunpack.c.l.b16 %v342
      %v855 = vunpack.c.l.b16 %v343
      %v856 = vunpack.c.l.b16 %v344
      %v857 = vunpack.c.l.b16 %v345
      %v858 = vunpack.c.l.b16 %v346
      %v859 = vunpack.c.l.b16 %v347
      %v860 = vunpack.c.l.b16 %v348
      %v861 = vunpack.c.l.b16 %v349
      %v862 = vunpack.c.l.b16 %v350
      %v863 = vunpack.c.l.b16 %v351
      %v864 = vunpack.c.l.b16 %v352
      %v865 = vunpack.c.l.b16 %v353
      %v866 = vunpack.c.l.b16 %v354
      %v867 = vunpack.c.l.b16 %v355
      %v868 = vunpack.c.l.b16 %v356
      %v869 = vunpack.c.l.b16 %v357
      %v870 = vunpack.c.l.b16 %v358
      %v871 = vunpack.c.l.b16 %v359
      %v872 = vunpack.c.l.b16 %v360
      %v873 = vunpack.c.l.b16 %v361
      %v874 = vunpack.c.l.b16 %v362
      %v875 = vunpack.c.l.b16 %v363
      %v876 = vunpack.c.l.b16 %v364
      %v877 = vunpack.c.l.b16 %v365
      %v878 = vunpack.c.l.b16 %v366
      %v879 = vunpack.c.l.b16 %v367
      %v880 = vunpack.c.l.b16 %v368
      %v881 = vunpack.c.l.b16 %v369
      %v882 = vunpack.c.l.b16 %v370
      %v883 = vunpack.c.l.b16 %v371
      %v884 = vunpack.c.l.b16 %v372
      %v885 = vunpack.c.l.b16 %v373
      %v886 = vunpack.c.l.b16 %v374
      %v887 = vunpack.c.l.b16 %v375
      %v888 = vpack.c.b16 %v825, %v824
      %v889 = vpack.c.b16 %v827, %v826
      %v890 = vpack.c.b16 %v829, %v828
      %v891 = vpack.c.b16 %v831, %v830
      %v892 = vpack.c.b16 %v833, %v832
      %v893 = vpack.c.b16 %v835, %v834
      %v894 = vpack.c.b16 %v837, %v836
      %v895 = vpack.c.b16 %v839, %v838
      %v896 = vpack.c.b16 %v841, %v840
      %v897 = vpack.c.b16 %v843, %v842
      %v898 = vpack.c.b16 %v845, %v844
      %v899 = vpack.c.b16 %v847, %v846
      %v900 = vpack.c.b16 %v849, %v848
      %v901 = vpack.c.b16 %v851, %v850
      %v902 = vpack.c.b16 %v853, %v852
      %v903 = vpack.c.b16 %v855, %v854
      %v904 = vpack.c.b16 %v857, %v856
      %v905 = vpack.c.b16 %v859, %v858
      %v906 = vpack.c.b16 %v861, %v860
      %v907 = vpack.c.b16 %v863, %v862
      %v908 = vpack.c.b16 %v865, %v864
      %v909 = vpack.c.b16 %v867, %v866
      %v910 = vpack.c.b16 %v869, %v868
      %v911 = vpack.c.b16 %v871, %v870
      %v912 = vpack.c.b16 %v873, %v872
      %v913 = vpack.c.b16 %v875, %v874
      %v914 = vpack.c.b16 %v877, %v876
      %v915 = vpack.c.b16 %v879, %v878
      %v916 = vpack.c.b16 %v881, %v880
      %v917 = vpack.c.b16 %v883, %v882
      %v918 = vpack.c.b16 %v885, %v884
      %v919 = vpack.c.b16 %v887, %v886
      %952 = vmatprep.subr.bf16.mxu0 %v297
      %953 = vmatpush1.bf16.msra.mxu0 %v296
      %954 = vmatprep.subr.bf16.mxu0 %v299
      %955 = vmatpush1.bf16.msra.mxu0 %v298
      %956 = vmatprep.subr.bf16.mxu0 %v301
      %957 = vmatpush1.bf16.msra.mxu0 %v300
      %958 = vmatprep.subr.bf16.mxu0 %v303
      %959 = vmatpush1.bf16.msra.mxu0 %v302
      %960 = vmatprep.subr.bf16.mxu0 %v305
      %961 = vmatpush1.bf16.msra.mxu0 %v304
      %962 = vmatprep.subr.bf16.mxu0 %v307
      %963 = vmatpush1.bf16.msra.mxu0 %v306
      %964 = vmatprep.subr.bf16.mxu0 %v309
      %965 = vmatpush1.bf16.msra.mxu0 %v308
      %966 = vmatprep.subr.bf16.mxu0 %v311
      %967 = vmatpush1.bf16.msra.mxu0 %v310
      %968 = vmatprep.subr.bf16.mxu0 0
      %969 = vmatpush1.bf16.msra.mxu0 0
      %970 = vmatprep.subr.bf16.mxu0 0
      %971 = vmatpush1.bf16.msra.mxu0 0
      %972 = vmatprep.subr.bf16.mxu0 0
      %973 = vmatpush1.bf16.msra.mxu0 0
      %974 = vmatprep.subr.bf16.mxu0 0
      %975 = vmatpush1.bf16.msra.mxu0 0
      %976 = vmatprep.subr.bf16.mxu0 0
      %977 = vmatpush1.bf16.msra.mxu0 0
      %978 = vmatprep.subr.bf16.mxu0 0
      %979 = vmatpush1.bf16.msra.mxu0 0
      %980 = vmatprep.subr.bf16.mxu0 0
      %981 = vmatpush1.bf16.msra.mxu0 0
      %982 = vmatprep.subr.bf16.mxu0 0
      %983 = vmatpush1.bf16.msra.mxu0 0
      %984 = vmatprep.mubr.bf16.mxu0 0
      %985 = vmatmul.mubr.bf16.gmra.mrb[0].mxu0 %v888
      %v986 = vpop.f32.mrb[0].mxu0
      %v987 = vadd.f32 %v443, %v986
      %v988 = vpop.f32.mrb[0].mxu0
      %v989 = vadd.f32 %v443, %v988
      %v990 = vpop.f32.mrb[0].mxu0
      %v991 = vadd.f32 %v448, %v990
      %v992 = vpop.f32.mrb[0].mxu0
      %v993 = vadd.f32 %v448, %v992
      %994 = vmatprep.mubr.bf16.mxu0 0
      %995 = vmatmul.mubr.bf16.gmra.mrb[0].mxu0 %v889
      %v996 = vpop.f32.mrb[0].mxu0
      %v997 = vadd.f32 %v453, %v996
      %v998 = vpop.f32.mrb[0].mxu0
      %v999 = vadd.f32 %v453, %v998
      %v1000 = vpop.f32.mrb[0].mxu0
      %v1001 = vadd.f32 %v458, %v1000
      %v1002 = vpop.f32.mrb[0].mxu0
      %v1003 = vadd.f32 %v458, %v1002
      %1004 = vmatprep.mubr.bf16.mxu0 0
      %1005 = vmatmul.mubr.bf16.gmra.mrb[0].mxu0 %v890
      %v1006 = vpop.f32.mrb[0].mxu0
      %v1007 = vadd.f32 %v463, %v1006
      %v1008 = vpop.f32.mrb[0].mxu0
      %v1009 = vadd.f32 %v463, %v1008
      %v1010 = vpop.f32.mrb[0].mxu0
      %v1011 = vadd.f32 %v468, %v1010
      %v1012 = vpop.f32.mrb[0].mxu0
      %v1013 = vadd.f32 %v468, %v1012
      %1014 = vmatprep.mubr.bf16.mxu0 0
      %1015 = vmatmul.mubr.bf16.gmra.mrb[0].mxu0 %v891
      %v1016 = vpop.f32.mrb[0].mxu0
      %v1017 = vadd.f32 %v473, %v1016
      %v1018 = vpop.f32.mrb[0].mxu0
      %v1019 = vadd.f32 %v473, %v1018
      %v1020 = vpop.f32.mrb[0].mxu0
      %v1021 = vadd.f32 %v478, %v1020
      %v1022 = vpop.f32.mrb[0].mxu0
      %v1023 = vadd.f32 %v478, %v1022
      %1024 = vmatprep.mubr.bf16.mxu0 0
      %1025 = vmatmul.mubr.bf16.gmra.mrb[0].mxu0 %v892
      %v1026 = vpop.f32.mrb[0].mxu0
      %v1027 = vadd.f32 %v483, %v1026
      %v1028 = vpop.f32.mrb[0].mxu0
      %v1029 = vadd.f32 %v483, %v1028
      %v1030 = vpop.f32.mrb[0].mxu0
      %v1031 = vadd.f32 %v488, %v1030
      %v1032 = vpop.f32.mrb[0].mxu0
      %v1033 = vadd.f32 %v488, %v1032
      %1034 = vmatprep.mubr.bf16.mxu0 0
      %1035 = vmatmul.mubr.bf16.gmra.mrb[0].mxu0 %v893
      %v1036 = vpop.f32.mrb[0].mxu0
      %v1037 = vadd.f32 %v493, %v1036
      %v1038 = vpop.f32.mrb[0].mxu0
      %v1039 = vadd.f32 %v493, %v1038
      %v1040 = vpop.f32.mrb[0].mxu0
      %v1041 = vadd.f32 %v498, %v1040
      %v1042 = vpop.f32.mrb[0].mxu0
      %v1043 = vadd.f32 %v498, %v1042
      %1044 = vmatprep.mubr.bf16.mxu0 0
      %1045 = vmatmul.mubr.bf16.gmra.mrb[0].mxu0 %v894
      %v1046 = vpop.f32.mrb[0].mxu0
      %v1047 = vadd.f32 %v503, %v1046
      %v1048 = vpop.f32.mrb[0].mxu0
      %v1049 = vadd.f32 %v503, %v1048
      %v1050 = vpop.f32.mrb[0].mxu0
      %v1051 = vadd.f32 %v508, %v1050
      %v1052 = vpop.f32.mrb[0].mxu0
      %v1053 = vadd.f32 %v508, %v1052
      %1054 = vmatprep.mubr.bf16.mxu0 0
      %1055 = vmatmul.mubr.bf16.gmra.mrb[0].mxu0 %v895
      %v1056 = vpop.f32.mrb[0].mxu0
      %v1057 = vadd.f32 %v513, %v1056
      %v1058 = vpop.f32.mrb[0].mxu0
      %v1059 = vadd.f32 %v513, %v1058
      %v1060 = vpop.f32.mrb[0].mxu0
      %v1061 = vadd.f32 %v518, %v1060
      %v1062 = vpop.f32.mrb[0].mxu0
      %v1063 = vadd.f32 %v518, %v1062
      %1064 = vmatprep.mubr.bf16.mxu0 0
      %1065 = vmatmul.mubr.bf16.gmra.mrb[0].mxu0 %v896
      %v1066 = vpop.f32.mrb[0].mxu0
      %v1067 = vadd.f32 %v523, %v1066
      %v1068 = vpop.f32.mrb[0].mxu0
      %v1069 = vadd.f32 %v523, %v1068
      %v1070 = vpop.f32.mrb[0].mxu0
      %v1071 = vadd.f32 %v528, %v1070
      %v1072 = vpop.f32.mrb[0].mxu0
      %v1073 = vadd.f32 %v528, %v1072
      %1074 = vmatprep.mubr.bf16.mxu0 0
      %1075 = vmatmul.mubr.bf16.gmra.mrb[0].mxu0 %v897
      %v1076 = vpop.f32.mrb[0].mxu0
      %v1077 = vadd.f32 %v533, %v1076
      %v1078 = vpop.f32.mrb[0].mxu0
      %v1079 = vadd.f32 %v533, %v1078
      %v1080 = vpop.f32.mrb[0].mxu0
      %v1081 = vadd.f32 %v538, %v1080
      %v1082 = vpop.f32.mrb[0].mxu0
      %v1083 = vadd.f32 %v538, %v1082
      %1084 = vmatprep.mubr.bf16.mxu0 0
      %1085 = vmatmul.mubr.bf16.gmra.mrb[0].mxu0 %v898
      %v1086 = vpop.f32.mrb[0].mxu0
      %v1087 = vadd.f32 %v543, %v1086
      %v1088 = vpop.f32.mrb[0].mxu0
      %v1089 = vadd.f32 %v543, %v1088
      %v1090 = vpop.f32.mrb[0].mxu0
      %v1091 = vadd.f32 %v548, %v1090
      %v1092 = vpop.f32.mrb[0].mxu0
      %v1093 = vadd.f32 %v548, %v1092
      %1094 = vmatprep.mubr.bf16.mxu0 0
      %1095 = vmatmul.mubr.bf16.gmra.mrb[0].mxu0 %v899
      %v1096 = vpop.f32.mrb[0].mxu0
      %v1097 = vadd.f32 %v553, %v1096
      %v1098 = vpop.f32.mrb[0].mxu0
      %v1099 = vadd.f32 %v553, %v1098
      %v1100 = vpop.f32.mrb[0].mxu0
      %v1101 = vadd.f32 %v558, %v1100
      %v1102 = vpop.f32.mrb[0].mxu0
      %v1103 = vadd.f32 %v558, %v1102
      %1104 = vmatprep.mubr.bf16.mxu0 0
      %1105 = vmatmul.mubr.bf16.gmra.mrb[0].mxu0 %v900
      %v1106 = vpop.f32.mrb[0].mxu0
      %v1107 = vadd.f32 %v563, %v1106
      %v1108 = vpop.f32.mrb[0].mxu0
      %v1109 = vadd.f32 %v563, %v1108
      %v1110 = vpop.f32.mrb[0].mxu0
      %v1111 = vadd.f32 %v568, %v1110
      %v1112 = vpop.f32.mrb[0].mxu0
      %v1113 = vadd.f32 %v568, %v1112
      %1114 = vmatprep.mubr.bf16.mxu0 0
      %1115 = vmatmul.mubr.bf16.gmra.mrb[0].mxu0 %v901
      %v1116 = vpop.f32.mrb[0].mxu0
      %v1117 = vadd.f32 %v573, %v1116
      %v1118 = vpop.f32.mrb[0].mxu0
      %v1119 = vadd.f32 %v573, %v1118
      %v1120 = vpop.f32.mrb[0].mxu0
      %v1121 = vadd.f32 %v578, %v1120
      %v1122 = vpop.f32.mrb[0].mxu0
      %v1123 = vadd.f32 %v578, %v1122
      %1124 = vmatprep.mubr.bf16.mxu0 0
      %1125 = vmatmul.mubr.bf16.gmra.mrb[0].mxu0 %v902
      %v1126 = vpop.f32.mrb[0].mxu0
      %v1127 = vadd.f32 %v583, %v1126
      %v1128 = vpop.f32.mrb[0].mxu0
      %v1129 = vadd.f32 %v583, %v1128
      %v1130 = vpop.f32.mrb[0].mxu0
      %v1131 = vadd.f32 %v588, %v1130
      %v1132 = vpop.f32.mrb[0].mxu0
      %v1133 = vadd.f32 %v588, %v1132
      %1134 = vmatprep.mubr.bf16.mxu0 0
      %1135 = vmatmul.mubr.bf16.gmra.mrb[0].mxu0 %v903
      %v1136 = vpop.f32.mrb[0].mxu0
      %v1137 = vadd.f32 %v593, %v1136
      %v1138 = vpop.f32.mrb[0].mxu0
      %v1139 = vadd.f32 %v593, %v1138
      %v1140 = vpop.f32.mrb[0].mxu0
      %v1141 = vadd.f32 %v598, %v1140
      %v1142 = vpop.f32.mrb[0].mxu0
      %v1143 = vadd.f32 %v598, %v1142
      %1144 = vmatprep.mubr.bf16.mxu0 0
      %1145 = vmatmul.mubr.bf16.gmra.mrb[0].mxu0 %v904
      %v1146 = vpop.f32.mrb[0].mxu0
      %v1147 = vadd.f32 %v603, %v1146
      %v1148 = vpop.f32.mrb[0].mxu0
      %v1149 = vadd.f32 %v603, %v1148
      %v1150 = vpop.f32.mrb[0].mxu0
      %v1151 = vadd.f32 %v608, %v1150
      %v1152 = vpop.f32.mrb[0].mxu0
      %v1153 = vadd.f32 %v608, %v1152
      %1154 = vmatprep.mubr.bf16.mxu0 0
      %1155 = vmatmul.mubr.bf16.gmra.mrb[0].mxu0 %v905
      %v1156 = vpop.f32.mrb[0].mxu0
      %v1157 = vadd.f32 %v613, %v1156
      %v1158 = vpop.f32.mrb[0].mxu0
      %v1159 = vadd.f32 %v613, %v1158
      %v1160 = vpop.f32.mrb[0].mxu0
      %v1161 = vadd.f32 %v618, %v1160
      %v1162 = vpop.f32.mrb[0].mxu0
      %v1163 = vadd.f32 %v618, %v1162
      %1164 = vmatprep.mubr.bf16.mxu0 0
      %1165 = vmatmul.mubr.bf16.gmra.mrb[0].mxu0 %v906
      %v1166 = vpop.f32.mrb[0].mxu0
      %v1167 = vadd.f32 %v623, %v1166
      %v1168 = vpop.f32.mrb[0].mxu0
      %v1169 = vadd.f32 %v623, %v1168
      %v1170 = vpop.f32.mrb[0].mxu0
      %v1171 = vadd.f32 %v628, %v1170
      %v1172 = vpop.f32.mrb[0].mxu0
      %v1173 = vadd.f32 %v628, %v1172
      %1174 = vmatprep.mubr.bf16.mxu0 0
      %1175 = vmatmul.mubr.bf16.gmra.mrb[0].mxu0 %v907
      %v1176 = vpop.f32.mrb[0].mxu0
      %v1177 = vadd.f32 %v633, %v1176
      %v1178 = vpop.f32.mrb[0].mxu0
      %v1179 = vadd.f32 %v633, %v1178
      %v1180 = vpop.f32.mrb[0].mxu0
      %v1181 = vadd.f32 %v638, %v1180
      %v1182 = vpop.f32.mrb[0].mxu0
      %v1183 = vadd.f32 %v638, %v1182
      %1184 = vmatprep.mubr.bf16.mxu0 0
      %1185 = vmatmul.mubr.bf16.gmra.mrb[0].mxu0 %v908
      %v1186 = vpop.f32.mrb[0].mxu0
      %v1187 = vadd.f32 %v643, %v1186
      %v1188 = vpop.f32.mrb[0].mxu0
      %v1189 = vadd.f32 %v643, %v1188
      %v1190 = vpop.f32.mrb[0].mxu0
      %v1191 = vadd.f32 %v648, %v1190
      %v1192 = vpop.f32.mrb[0].mxu0
      %v1193 = vadd.f32 %v648, %v1192
      %1194 = vmatprep.mubr.bf16.mxu0 0
      %1195 = vmatmul.mubr.bf16.gmra.mrb[0].mxu0 %v909
      %v1196 = vpop.f32.mrb[0].mxu0
      %v1197 = vadd.f32 %v653, %v1196
      %v1198 = vpop.f32.mrb[0].mxu0
      %v1199 = vadd.f32 %v653, %v1198
      %v1200 = vpop.f32.mrb[0].mxu0
      %v1201 = vadd.f32 %v658, %v1200
      %v1202 = vpop.f32.mrb[0].mxu0
      %v1203 = vadd.f32 %v658, %v1202
      %1204 = vmatprep.mubr.bf16.mxu0 0
      %1205 = vmatmul.mubr.bf16.gmra.mrb[0].mxu0 %v910
      %v1206 = vpop.f32.mrb[0].mxu0
      %v1207 = vadd.f32 %v663, %v1206
      %v1208 = vpop.f32.mrb[0].mxu0
      %v1209 = vadd.f32 %v663, %v1208
      %v1210 = vpop.f32.mrb[0].mxu0
      %v1211 = vadd.f32 %v668, %v1210
      %v1212 = vpop.f32.mrb[0].mxu0
      %v1213 = vadd.f32 %v668, %v1212
      %1214 = vmatprep.mubr.bf16.mxu0 0
      %1215 = vmatmul.mubr.bf16.gmra.mrb[0].mxu0 %v911
      %v1216 = vpop.f32.mrb[0].mxu0
      %v1217 = vadd.f32 %v673, %v1216
      %v1218 = vpop.f32.mrb[0].mxu0
      %v1219 = vadd.f32 %v673, %v1218
      %v1220 = vpop.f32.mrb[0].mxu0
      %v1221 = vadd.f32 %v678, %v1220
      %v1222 = vpop.f32.mrb[0].mxu0
      %v1223 = vadd.f32 %v678, %v1222
      %1224 = vmatprep.mubr.bf16.mxu0 0
      %1225 = vmatmul.mubr.bf16.gmra.mrb[0].mxu0 %v912
      %v1226 = vpop.f32.mrb[0].mxu0
      %v1227 = vadd.f32 %v683, %v1226
      %v1228 = vpop.f32.mrb[0].mxu0
      %v1229 = vadd.f32 %v683, %v1228
      %v1230 = vpop.f32.mrb[0].mxu0
      %v1231 = vadd.f32 %v688, %v1230
      %v1232 = vpop.f32.mrb[0].mxu0
      %v1233 = vadd.f32 %v688, %v1232
      %1234 = vmatprep.mubr.bf16.mxu0 0
      %1235 = vmatmul.mubr.bf16.gmra.mrb[0].mxu0 %v913
      %v1236 = vpop.f32.mrb[0].mxu0
      %v1237 = vadd.f32 %v693, %v1236
      %v1238 = vpop.f32.mrb[0].mxu0
      %v1239 = vadd.f32 %v693, %v1238
      %v1240 = vpop.f32.mrb[0].mxu0
      %v1241 = vadd.f32 %v698, %v1240
      %v1242 = vpop.f32.mrb[0].mxu0
      %v1243 = vadd.f32 %v698, %v1242
      %1244 = vmatprep.mubr.bf16.mxu0 0
      %1245 = vmatmul.mubr.bf16.gmra.mrb[0].mxu0 %v914
      %v1246 = vpop.f32.mrb[0].mxu0
      %v1247 = vadd.f32 %v703, %v1246
      %v1248 = vpop.f32.mrb[0].mxu0
      %v1249 = vadd.f32 %v703, %v1248
      %v1250 = vpop.f32.mrb[0].mxu0
      %v1251 = vadd.f32 %v708, %v1250
      %v1252 = vpop.f32.mrb[0].mxu0
      %v1253 = vadd.f32 %v708, %v1252
      %1254 = vmatprep.mubr.bf16.mxu0 0
      %1255 = vmatmul.mubr.bf16.gmra.mrb[0].mxu0 %v915
      %v1256 = vpop.f32.mrb[0].mxu0
      %v1257 = vadd.f32 %v713, %v1256
      %v1258 = vpop.f32.mrb[0].mxu0
      %v1259 = vadd.f32 %v713, %v1258
      %v1260 = vpop.f32.mrb[0].mxu0
      %v1261 = vadd.f32 %v718, %v1260
      %v1262 = vpop.f32.mrb[0].mxu0
      %v1263 = vadd.f32 %v718, %v1262
      %1264 = vmatprep.mubr.bf16.mxu0 0
      %1265 = vmatmul.mubr.bf16.gmra.mrb[0].mxu0 %v916
      %v1266 = vpop.f32.mrb[0].mxu0
      %v1267 = vadd.f32 %v723, %v1266
      %v1268 = vpop.f32.mrb[0].mxu0
      %v1269 = vadd.f32 %v723, %v1268
      %v1270 = vpop.f32.mrb[0].mxu0
      %v1271 = vadd.f32 %v728, %v1270
      %v1272 = vpop.f32.mrb[0].mxu0
      %v1273 = vadd.f32 %v728, %v1272
      %1274 = vmatprep.mubr.bf16.mxu0 0
      %1275 = vmatmul.mubr.bf16.gmra.mrb[0].mxu0 %v917
      %v1276 = vpop.f32.mrb[0].mxu0
      %v1277 = vadd.f32 %v733, %v1276
      %v1278 = vpop.f32.mrb[0].mxu0
      %v1279 = vadd.f32 %v733, %v1278
      %v1280 = vpop.f32.mrb[0].mxu0
      %v1281 = vadd.f32 %v738, %v1280
      %v1282 = vpop.f32.mrb[0].mxu0
      %v1283 = vadd.f32 %v738, %v1282
      %1284 = vmatprep.mubr.bf16.mxu0 0
      %1285 = vmatmul.mubr.bf16.gmra.mrb[0].mxu0 %v918
      %v1286 = vpop.f32.mrb[0].mxu0
      %v1287 = vadd.f32 %v743, %v1286
      %v1288 = vpop.f32.mrb[0].mxu0
      %v1289 = vadd.f32 %v743, %v1288
      %v1290 = vpop.f32.mrb[0].mxu0
      %v1291 = vadd.f32 %v748, %v1290
      %v1292 = vpop.f32.mrb[0].mxu0
      %v1293 = vadd.f32 %v748, %v1292
      %1294 = vmatprep.mubr.bf16.mxu0 0
      %1295 = vmatmul.mubr.bf16.gmra.mrb[0].mxu0 %v919
      %v1296 = vpop.f32.mrb[0].mxu0
      %v1297 = vadd.f32 %v753, %v1296
      %v1298 = vpop.f32.mrb[0].mxu0
      %v1299 = vadd.f32 %v753, %v1298
      %v1300 = vpop.f32.mrb[0].mxu0
      %v1301 = vadd.f32 %v758, %v1300
      %v1302 = vpop.f32.mrb[0].mxu0
      %v1303 = vadd.f32 %v758, %v1302
      %1304 = vdwg.mxu0
      %v1305 = vmul.f32 %v987, 0.2
      %v1306 = vmul.f32 %v989, 0.2
      %v1307 = vmul.f32 %v991, 0.2
      %v1308 = vmul.f32 %v993, 0.2
      %v1309 = vmul.f32 %v997, 0.2
      %v1310 = vmul.f32 %v999, 0.2
      %v1311 = vmul.f32 %v1001, 0.2
      %v1312 = vmul.f32 %v1003, 0.2
      %v1313 = vmul.f32 %v1007, 0.2
      %v1314 = vmul.f32 %v1009, 0.2
      %v1315 = vmul.f32 %v1011, 0.2
      %v1316 = vmul.f32 %v1013, 0.2
      %v1317 = vmul.f32 %v1017, 0.2
      %v1318 = vmul.f32 %v1019, 0.2
      %v1319 = vmul.f32 %v1021, 0.2
      %v1320 = vmul.f32 %v1023, 0.2
      %v1321 = vmul.f32 %v1027, 0.2
      %v1322 = vmul.f32 %v1029, 0.2
      %v1323 = vmul.f32 %v1031, 0.2
      %v1324 = vmul.f32 %v1033, 0.2
      %v1325 = vmul.f32 %v1037, 0.2
      %v1326 = vmul.f32 %v1039, 0.2
      %v1327 = vmul.f32 %v1041, 0.2
      %v1328 = vmul.f32 %v1043, 0.2
      %v1329 = vmul.f32 %v1047, 0.2
      %v1330 = vmul.f32 %v1049, 0.2
      %v1331 = vmul.f32 %v1051, 0.2
      %v1332 = vmul.f32 %v1053, 0.2
      %v1333 = vmul.f32 %v1057, 0.2
      %v1334 = vmul.f32 %v1059, 0.2
      %v1335 = vmul.f32 %v1061, 0.2
      %v1336 = vmul.f32 %v1063, 0.2
      %v1337 = vmul.f32 %v1067, 0.2
      %v1338 = vmul.f32 %v1069, 0.2
      %v1339 = vmul.f32 %v1071, 0.2
      %v1340 = vmul.f32 %v1073, 0.2
      %v1341 = vmul.f32 %v1077, 0.2
      %v1342 = vmul.f32 %v1079, 0.2
      %v1343 = vmul.f32 %v1081, 0.2
      %v1344 = vmul.f32 %v1083, 0.2
      %v1345 = vmul.f32 %v1087, 0.2
      %v1346 = vmul.f32 %v1089, 0.2
      %v1347 = vmul.f32 %v1091, 0.2
      %v1348 = vmul.f32 %v1093, 0.2
      %v1349 = vmul.f32 %v1097, 0.2
      %v1350 = vmul.f32 %v1099, 0.2
      %v1351 = vmul.f32 %v1101, 0.2
      %v1352 = vmul.f32 %v1103, 0.2
      %v1353 = vmul.f32 %v1107, 0.2
      %v1354 = vmul.f32 %v1109, 0.2
      %v1355 = vmul.f32 %v1111, 0.2
      %v1356 = vmul.f32 %v1113, 0.2
      %v1357 = vmul.f32 %v1117, 0.2
      %v1358 = vmul.f32 %v1119, 0.2
      %v1359 = vmul.f32 %v1121, 0.2
      %v1360 = vmul.f32 %v1123, 0.2
      %v1361 = vmul.f32 %v1127, 0.2
      %v1362 = vmul.f32 %v1129, 0.2
      %v1363 = vmul.f32 %v1131, 0.2
      %v1364 = vmul.f32 %v1133, 0.2
      %v1365 = vmul.f32 %v1137, 0.2
      %v1366 = vmul.f32 %v1139, 0.2
      %v1367 = vmul.f32 %v1141, 0.2
      %v1368 = vmul.f32 %v1143, 0.2
      %v1369 = vmul.f32 %v1147, 0.2
      %v1370 = vmul.f32 %v1149, 0.2
      %v1371 = vmul.f32 %v1151, 0.2
      %v1372 = vmul.f32 %v1153, 0.2
      %v1373 = vmul.f32 %v1157, 0.2
      %v1374 = vmul.f32 %v1159, 0.2
      %v1375 = vmul.f32 %v1161, 0.2
      %v1376 = vmul.f32 %v1163, 0.2
      %v1377 = vmul.f32 %v1167, 0.2
      %v1378 = vmul.f32 %v1169, 0.2
      %v1379 = vmul.f32 %v1171, 0.2
      %v1380 = vmul.f32 %v1173, 0.2
      %v1381 = vmul.f32 %v1177, 0.2
      %v1382 = vmul.f32 %v1179, 0.2
      %v1383 = vmul.f32 %v1181, 0.2
      %v1384 = vmul.f32 %v1183, 0.2
      %v1385 = vmul.f32 %v1187, 0.2
      %v1386 = vmul.f32 %v1189, 0.2
      %v1387 = vmul.f32 %v1191, 0.2
      %v1388 = vmul.f32 %v1193, 0.2
      %v1389 = vmul.f32 %v1197, 0.2
      %v1390 = vmul.f32 %v1199, 0.2
      %v1391 = vmul.f32 %v1201, 0.2
      %v1392 = vmul.f32 %v1203, 0.2
      %v1393 = vmul.f32 %v1207, 0.2
      %v1394 = vmul.f32 %v1209, 0.2
      %v1395 = vmul.f32 %v1211, 0.2
      %v1396 = vmul.f32 %v1213, 0.2
      %v1397 = vmul.f32 %v1217, 0.2
      %v1398 = vmul.f32 %v1219, 0.2
      %v1399 = vmul.f32 %v1221, 0.2
      %v1400 = vmul.f32 %v1223, 0.2
      %v1401 = vmul.f32 %v1227, 0.2
      %v1402 = vmul.f32 %v1229, 0.2
      %v1403 = vmul.f32 %v1231, 0.2
      %v1404 = vmul.f32 %v1233, 0.2
      %v1405 = vmul.f32 %v1237, 0.2
      %v1406 = vmul.f32 %v1239, 0.2
      %v1407 = vmul.f32 %v1241, 0.2
      %v1408 = vmul.f32 %v1243, 0.2
      %v1409 = vmul.f32 %v1247, 0.2
      %v1410 = vmul.f32 %v1249, 0.2
      %v1411 = vmul.f32 %v1251, 0.2
      %v1412 = vmul.f32 %v1253, 0.2
      %v1413 = vmul.f32 %v1257, 0.2
      %v1414 = vmul.f32 %v1259, 0.2
      %v1415 = vmul.f32 %v1261, 0.2
      %v1416 = vmul.f32 %v1263, 0.2
      %v1417 = vmul.f32 %v1267, 0.2
      %v1418 = vmul.f32 %v1269, 0.2
      %v1419 = vmul.f32 %v1271, 0.2
      %v1420 = vmul.f32 %v1273, 0.2
      %v1421 = vmul.f32 %v1277, 0.2
      %v1422 = vmul.f32 %v1279, 0.2
      %v1423 = vmul.f32 %v1281, 0.2
      %v1424 = vmul.f32 %v1283, 0.2
      %v1425 = vmul.f32 %v1287, 0.2
      %v1426 = vmul.f32 %v1289, 0.2
      %v1427 = vmul.f32 %v1291, 0.2
      %v1428 = vmul.f32 %v1293, 0.2
      %v1429 = vmul.f32 %v1297, 0.2
      %v1430 = vmul.f32 %v1299, 0.2
      %v1431 = vmul.f32 %v1301, 0.2
      %v1432 = vmul.f32 %v1303, 0.2
      %v1433 = vmax.f32 %v987, %v1305
      %v1434 = vmax.f32 %v989, %v1306
      %v1435 = vmax.f32 %v991, %v1307
      %v1436 = vmax.f32 %v993, %v1308
      %v1437 = vmax.f32 %v997, %v1309
      %v1438 = vmax.f32 %v999, %v1310
      %v1439 = vmax.f32 %v1001, %v1311
      %v1440 = vmax.f32 %v1003, %v1312
      %v1441 = vmax.f32 %v1007, %v1313
      %v1442 = vmax.f32 %v1009, %v1314
      %v1443 = vmax.f32 %v1011, %v1315
      %v1444 = vmax.f32 %v1013, %v1316
      %v1445 = vmax.f32 %v1017, %v1317
      %v1446 = vmax.f32 %v1019, %v1318
      %v1447 = vmax.f32 %v1021, %v1319
      %v1448 = vmax.f32 %v1023, %v1320
      %v1449 = vmax.f32 %v1027, %v1321
      %v1450 = vmax.f32 %v1029, %v1322
      %v1451 = vmax.f32 %v1031, %v1323
      %v1452 = vmax.f32 %v1033, %v1324
      %v1453 = vmax.f32 %v1037, %v1325
      %v1454 = vmax.f32 %v1039, %v1326
      %v1455 = vmax.f32 %v1041, %v1327
      %v1456 = vmax.f32 %v1043, %v1328
      %v1457 = vmax.f32 %v1047, %v1329
      %v1458 = vmax.f32 %v1049, %v1330
      %v1459 = vmax.f32 %v1051, %v1331
      %v1460 = vmax.f32 %v1053, %v1332
      %v1461 = vmax.f32 %v1057, %v1333
      %v1462 = vmax.f32 %v1059, %v1334
      %v1463 = vmax.f32 %v1061, %v1335
      %v1464 = vmax.f32 %v1063, %v1336
      %v1465 = vmax.f32 %v1067, %v1337
      %v1466 = vmax.f32 %v1069, %v1338
      %v1467 = vmax.f32 %v1071, %v1339
      %v1468 = vmax.f32 %v1073, %v1340
      %v1469 = vmax.f32 %v1077, %v1341
      %v1470 = vmax.f32 %v1079, %v1342
      %v1471 = vmax.f32 %v1081, %v1343
      %v1472 = vmax.f32 %v1083, %v1344
      %v1473 = vmax.f32 %v1087, %v1345
      %v1474 = vmax.f32 %v1089, %v1346
      %v1475 = vmax.f32 %v1091, %v1347
      %v1476 = vmax.f32 %v1093, %v1348
      %v1477 = vmax.f32 %v1097, %v1349
      %v1478 = vmax.f32 %v1099, %v1350
      %v1479 = vmax.f32 %v1101, %v1351
      %v1480 = vmax.f32 %v1103, %v1352
      %v1481 = vmax.f32 %v1107, %v1353
      %v1482 = vmax.f32 %v1109, %v1354
      %v1483 = vmax.f32 %v1111, %v1355
      %v1484 = vmax.f32 %v1113, %v1356
      %v1485 = vmax.f32 %v1117, %v1357
      %v1486 = vmax.f32 %v1119, %v1358
      %v1487 = vmax.f32 %v1121, %v1359
      %v1488 = vmax.f32 %v1123, %v1360
      %v1489 = vmax.f32 %v1127, %v1361
      %v1490 = vmax.f32 %v1129, %v1362
      %v1491 = vmax.f32 %v1131, %v1363
      %v1492 = vmax.f32 %v1133, %v1364
      %v1493 = vmax.f32 %v1137, %v1365
      %v1494 = vmax.f32 %v1139, %v1366
      %v1495 = vmax.f32 %v1141, %v1367
      %v1496 = vmax.f32 %v1143, %v1368
      %v1497 = vmax.f32 %v1147, %v1369
      %v1498 = vmax.f32 %v1149, %v1370
      %v1499 = vmax.f32 %v1151, %v1371
      %v1500 = vmax.f32 %v1153, %v1372
      %v1501 = vmax.f32 %v1157, %v1373
      %v1502 = vmax.f32 %v1159, %v1374
      %v1503 = vmax.f32 %v1161, %v1375
      %v1504 = vmax.f32 %v1163, %v1376
      %v1505 = vmax.f32 %v1167, %v1377
      %v1506 = vmax.f32 %v1169, %v1378
      %v1507 = vmax.f32 %v1171, %v1379
      %v1508 = vmax.f32 %v1173, %v1380
      %v1509 = vmax.f32 %v1177, %v1381
      %v1510 = vmax.f32 %v1179, %v1382
      %v1511 = vmax.f32 %v1181, %v1383
      %v1512 = vmax.f32 %v1183, %v1384
      %v1513 = vmax.f32 %v1187, %v1385
      %v1514 = vmax.f32 %v1189, %v1386
      %v1515 = vmax.f32 %v1191, %v1387
      %v1516 = vmax.f32 %v1193, %v1388
      %v1517 = vmax.f32 %v1197, %v1389
      %v1518 = vmax.f32 %v1199, %v1390
      %v1519 = vmax.f32 %v1201, %v1391
      %v1520 = vmax.f32 %v1203, %v1392
      %v1521 = vmax.f32 %v1207, %v1393
      %v1522 = vmax.f32 %v1209, %v1394
      %v1523 = vmax.f32 %v1211, %v1395
      %v1524 = vmax.f32 %v1213, %v1396
      %v1525 = vmax.f32 %v1217, %v1397
      %v1526 = vmax.f32 %v1219, %v1398
      %v1527 = vmax.f32 %v1221, %v1399
      %v1528 = vmax.f32 %v1223, %v1400
      %v1529 = vmax.f32 %v1227, %v1401
      %v1530 = vmax.f32 %v1229, %v1402
      %v1531 = vmax.f32 %v1231, %v1403
      %v1532 = vmax.f32 %v1233, %v1404
      %v1533 = vmax.f32 %v1237, %v1405
      %v1534 = vmax.f32 %v1239, %v1406
      %v1535 = vmax.f32 %v1241, %v1407
      %v1536 = vmax.f32 %v1243, %v1408
      %v1537 = vmax.f32 %v1247, %v1409
      %v1538 = vmax.f32 %v1249, %v1410
      %v1539 = vmax.f32 %v1251, %v1411
      %v1540 = vmax.f32 %v1253, %v1412
      %v1541 = vmax.f32 %v1257, %v1413
      %v1542 = vmax.f32 %v1259, %v1414
      %v1543 = vmax.f32 %v1261, %v1415
      %v1544 = vmax.f32 %v1263, %v1416
      %v1545 = vmax.f32 %v1267, %v1417
      %v1546 = vmax.f32 %v1269, %v1418
      %v1547 = vmax.f32 %v1271, %v1419
      %v1548 = vmax.f32 %v1273, %v1420
      %v1549 = vmax.f32 %v1277, %v1421
      %v1550 = vmax.f32 %v1279, %v1422
      %v1551 = vmax.f32 %v1281, %v1423
      %v1552 = vmax.f32 %v1283, %v1424
      %v1553 = vmax.f32 %v1287, %v1425
      %v1554 = vmax.f32 %v1289, %v1426
      %v1555 = vmax.f32 %v1291, %v1427
      %v1556 = vmax.f32 %v1293, %v1428
      %v1557 = vmax.f32 %v1297, %v1429
      %v1558 = vmax.f32 %v1299, %v1430
      %v1559 = vmax.f32 %v1301, %v1431
      %v1560 = vmax.f32 %v1303, %v1432
      %v1561 = vld [vmem:[%s3] sm:$0xf]
      %v1562 = vpack.c.bf16 %v1435, %v1433
      %v1563 = vpack.c.bf16 %v1436, %v1434
      %v1564 = vpack.c.bf16 %v1439, %v1437
      %v1565 = vpack.c.bf16 %v1440, %v1438
      %v1566 = vpack.c.bf16 %v1443, %v1441
      %v1567 = vpack.c.bf16 %v1444, %v1442
      %v1568 = vpack.c.bf16 %v1447, %v1445
      %v1569 = vpack.c.bf16 %v1448, %v1446
      %v1570 = vpack.c.bf16 %v1451, %v1449
      %v1571 = vpack.c.bf16 %v1452, %v1450
      %v1572 = vpack.c.bf16 %v1455, %v1453
      %v1573 = vpack.c.bf16 %v1456, %v1454
      %v1574 = vpack.c.bf16 %v1459, %v1457
      %v1575 = vpack.c.bf16 %v1460, %v1458
      %v1576 = vpack.c.bf16 %v1463, %v1461
      %v1577 = vpack.c.bf16 %v1464, %v1462
      %v1578 = vpack.c.bf16 %v1467, %v1465
      %v1579 = vpack.c.bf16 %v1468, %v1466
      %v1580 = vpack.c.bf16 %v1471, %v1469
      %v1581 = vpack.c.bf16 %v1472, %v1470
      %v1582 = vpack.c.bf16 %v1475, %v1473
      %v1583 = vpack.c.bf16 %v1476, %v1474
      %v1584 = vpack.c.bf16 %v1479, %v1477
      %v1585 = vpack.c.bf16 %v1480, %v1478
      %v1586 = vpack.c.bf16 %v1483, %v1481
      %v1587 = vpack.c.bf16 %v1484, %v1482
      %v1588 = vpack.c.bf16 %v1487, %v1485
      %v1589 = vpack.c.bf16 %v1488, %v1486
      %v1590 = vpack.c.bf16 %v1491, %v1489
      %v1591 = vpack.c.bf16 %v1492, %v1490
      %v1592 = vpack.c.bf16 %v1495, %v1493
      %v1593 = vpack.c.bf16 %v1496, %v1494
      %v1594 = vpack.c.bf16 %v1499, %v1497
      %v1595 = vpack.c.bf16 %v1500, %v1498
      %v1596 = vpack.c.bf16 %v1503, %v1501
      %v1597 = vpack.c.bf16 %v1504, %v1502
      %v1598 = vpack.c.bf16 %v1507, %v1505
      %v1599 = vpack.c.bf16 %v1508, %v1506
      %v1600 = vpack.c.bf16 %v1511, %v1509
      %v1601 = vpack.c.bf16 %v1512, %v1510
      %v1602 = vpack.c.bf16 %v1515, %v1513
      %v1603 = vpack.c.bf16 %v1516, %v1514
      %v1604 = vpack.c.bf16 %v1519, %v1517
      %v1605 = vpack.c.bf16 %v1520, %v1518
      %v1606 = vpack.c.bf16 %v1523, %v1521
      %v1607 = vpack.c.bf16 %v1524, %v1522
      %v1608 = vpack.c.bf16 %v1527, %v1525
      %v1609 = vpack.c.bf16 %v1528, %v1526
      %v1610 = vpack.c.bf16 %v1531, %v1529
      %v1611 = vpack.c.bf16 %v1532, %v1530
      %v1612 = vpack.c.bf16 %v1535, %v1533
      %v1613 = vpack.c.bf16 %v1536, %v1534
      %v1614 = vpack.c.bf16 %v1539, %v1537
      %v1615 = vpack.c.bf16 %v1540, %v1538
      %v1616 = vpack.c.bf16 %v1543, %v1541
      %v1617 = vpack.c.bf16 %v1544, %v1542
      %v1618 = vpack.c.bf16 %v1547, %v1545
      %v1619 = vpack.c.bf16 %v1548, %v1546
      %v1620 = vpack.c.bf16 %v1551, %v1549
      %v1621 = vpack.c.bf16 %v1552, %v1550
      %v1622 = vpack.c.bf16 %v1555, %v1553
      %v1623 = vpack.c.bf16 %v1556, %v1554
      %v1624 = vpack.c.bf16 %v1559, %v1557
      %v1625 = vpack.c.bf16 %v1560, %v1558
      %s1626 = sld [smem:[#allocation2]]
      %v1627 = vstv %s1626
      %v1630 = vunpack.c.l.s4 1966171168
      %v1631 = vunpack.c.0.s8 %v1630
      %v1632 = vlaneseq
      %v1633 = vshrl.u32 %v1632, 7
      %v1634 = vsub.s32 %v1631, %v1633
      %v1635 = vrot.slane %v1561, %v1634
      %v1636 = vcombine.high %v1635, %v1635
      %v1638 = vunpack.c.l.s4 1966171168
      %v1639 = vunpack.c.0.s8 %v1638
      %v1640 = vlaneseq
      %v1641 = vshrl.u32 %v1640, 7
      %v1642 = vsub.s32 %v1639, %v1641
      %v1643 = vrot.slane %v1635, %v1642
      %v1645 = vunpack.c.l.s4 1966171168
      %v1646 = vunpack.c.0.s8 %v1645
      %v1647 = vlaneseq
      %v1648 = vshrl.u32 %v1647, 7
      %v1649 = vsub.s32 %v1646, %v1648
      %v1650 = vrot.slane %v1636, %v1649
      %v1651 = vcombine.high %v1643, %v1643
      %v1652 = vcombine.high %v1650, %v1650
      %1657 = vmatprep.subr.bf16.mxu0 %v1563
      %1658 = vmatpush1.bf16.msra.mxu0 %v1562
      %1659 = vmatprep.subr.bf16.mxu0 %v1565
      %1660 = vmatpush1.bf16.msra.mxu0 %v1564
      %1661 = vmatprep.subr.bf16.mxu0 %v1567
      %1662 = vmatpush1.bf16.msra.mxu0 %v1566
      %1663 = vmatprep.subr.bf16.mxu0 %v1569
      %1664 = vmatpush1.bf16.msra.mxu0 %v1568
      %1665 = vmatprep.subr.bf16.mxu0 %v1571
      %1666 = vmatpush1.bf16.msra.mxu0 %v1570
      %1667 = vmatprep.subr.bf16.mxu0 %v1573
      %1668 = vmatpush1.bf16.msra.mxu0 %v1572
      %1669 = vmatprep.subr.bf16.mxu0 %v1575
      %1670 = vmatpush1.bf16.msra.mxu0 %v1574
      %1671 = vmatprep.subr.bf16.mxu0 %v1577
      %1672 = vmatpush1.bf16.msra.mxu0 %v1576
      %1673 = vmatprep.subr.bf16.mxu0 %v1579
      %1674 = vmatpush1.bf16.msra.mxu0 %v1578
      %1675 = vmatprep.subr.bf16.mxu0 %v1581
      %1676 = vmatpush1.bf16.msra.mxu0 %v1580
      %1677 = vmatprep.subr.bf16.mxu0 %v1583
      %1678 = vmatpush1.bf16.msra.mxu0 %v1582
      %1679 = vmatprep.subr.bf16.mxu0 %v1585
      %1680 = vmatpush1.bf16.msra.mxu0 %v1584
      %1681 = vmatprep.subr.bf16.mxu0 %v1587
      %1682 = vmatpush1.bf16.msra.mxu0 %v1586
      %1683 = vmatprep.subr.bf16.mxu0 %v1589
      %1684 = vmatpush1.bf16.msra.mxu0 %v1588
      %1685 = vmatprep.subr.bf16.mxu0 %v1591
      %1686 = vmatpush1.bf16.msra.mxu0 %v1590
      %1687 = vmatprep.subr.bf16.mxu0 %v1593
      %1688 = vmatpush1.bf16.msra.mxu0 %v1592
      %1689 = vmatprep.mubr.bf16.mxu0 %v1650
      %1690 = vmatmul.mubr.bf16.gmra.mrb[0].mxu0 %v1643
      %v1691 = vpop.f32.mrb[0].mxu0
      %v1692 = vadd.f32 %v1627, %v1691
      %v1693 = vpop.f32.mrb[0].mxu0
      %v1694 = vadd.f32 %v1627, %v1693
      %v1695 = vpop.f32.mrb[0].mxu0
      %v1696 = vpop.f32.mrb[0].mxu0
      %1697 = vdwg.mxu0
      %1698 = vmatprep.subr.bf16.mxu0 %v1595
      %1699 = vmatpush1.bf16.msra.mxu0 %v1594
      %1700 = vmatprep.subr.bf16.mxu0 %v1597
      %1701 = vmatpush1.bf16.msra.mxu0 %v1596
      %1702 = vmatprep.subr.bf16.mxu0 %v1599
      %1703 = vmatpush1.bf16.msra.mxu0 %v1598
      %1704 = vmatprep.subr.bf16.mxu0 %v1601
      %1705 = vmatpush1.bf16.msra.mxu0 %v1600
      %1706 = vmatprep.subr.bf16.mxu0 %v1603
      %1707 = vmatpush1.bf16.msra.mxu0 %v1602
      %1708 = vmatprep.subr.bf16.mxu0 %v1605
      %1709 = vmatpush1.bf16.msra.mxu0 %v1604
      %1710 = vmatprep.subr.bf16.mxu0 %v1607
      %1711 = vmatpush1.bf16.msra.mxu0 %v1606
      %1712 = vmatprep.subr.bf16.mxu0 %v1609
      %1713 = vmatpush1.bf16.msra.mxu0 %v1608
      %1714 = vmatprep.subr.bf16.mxu0 %v1611
      %1715 = vmatpush1.bf16.msra.mxu0 %v1610
      %1716 = vmatprep.subr.bf16.mxu0 %v1613
      %1717 = vmatpush1.bf16.msra.mxu0 %v1612
      %1718 = vmatprep.subr.bf16.mxu0 %v1615
      %1719 = vmatpush1.bf16.msra.mxu0 %v1614
      %1720 = vmatprep.subr.bf16.mxu0 %v1617
      %1721 = vmatpush1.bf16.msra.mxu0 %v1616
      %1722 = vmatprep.subr.bf16.mxu0 %v1619
      %1723 = vmatpush1.bf16.msra.mxu0 %v1618
      %1724 = vmatprep.subr.bf16.mxu0 %v1621
      %1725 = vmatpush1.bf16.msra.mxu0 %v1620
      %1726 = vmatprep.subr.bf16.mxu0 %v1623
      %1727 = vmatpush1.bf16.msra.mxu0 %v1622
      %1728 = vmatprep.subr.bf16.mxu0 %v1625
      %1729 = vmatpush1.bf16.msra.mxu0 %v1624
      %1730 = vmatprep.mubr.bf16.mxu0 %v1652
      %1731 = vmatmul.mubr.bf16.gmra.mrb[0].mxu0 %v1651
      %v1732 = vpop.f32.mrb[0].mxu0
      %v1733 = vadd.f32 %v1692, %v1732
      %v1734 = vpop.f32.mrb[0].mxu0
      %v1735 = vadd.f32 %v1694, %v1734
      %v1736 = vpop.f32.mrb[0].mxu0
      %v1737 = vpop.f32.mrb[0].mxu0
      %1738 = vdwg.mxu0
      %v1741 = vcombine.low %v1733, %v1735
      %v1743 = vunpack.c.l.s4 1966171168
      %v1744 = vunpack.c.0.s8 %v1743
      %v1745 = vlaneseq
      %v1746 = vshrl.u32 %v1745, 7
      %v1747 = vsub.s32 %v1744, %v1746
      %v1748 = vrot.slane %v1741, %v1747
      %v1750 = vunpack.c.l.s4 1966171168
      %v1751 = vunpack.c.0.s8 %v1750
      %v1752 = vlaneseq
      %v1753 = vshrl.u32 %v1752, 7
      %v1754 = vsub.s32 %v1751, %v1753
      %v1755 = vrot.slane %v1748, %v1754
      %v1757 = vlaneseq
      %vm1758 = vcmp.ge.s32.totalorder %v1757, 0
      %vm1759 = vcmp.lt.s32.totalorder %v1757, 256
      %vm1760 = vmand %vm1758, %vm1759
      %1761 = vst.msk [vmem:[%s261] sm:$0x3] %vm1760, %v1755
      %s1762 = smul.u32 2, %s22
      %p1763 = scmp.lt.s32.totalorder %s21, 1
      %s1764 = scalar_select %p1763, %s21, 1
      %p1765 = scmp.lt.s32.totalorder %s1762, 1
      %s1766 = scalar_select %p1765, %s1762, 1
      %s1767 = smul.addr %s1764, 2
      %s1768 = sadd.s32 %s1766, %s1767
      %s1769 = scalar_lea.vmem %s5, %s1768
      // Predicated region
      $region41: #{domain_discriminator_im_forward.1} parent=39 // pred_check
        %p1770 = pneg %p161
      $region42: #{domain_discriminator_im_forward.1} parent=39 // pred_check_branch
        %1772 = sbr.rel (%p1770) target = $region44
      $region43: #{domain_discriminator_im_forward.1} parent=39 // pred_region
        %s1773 = smul.u32 2, %s22
      $region44: #{domain_discriminator_im_forward.1} parent=39 // pred_fallthru
        _
    $region40: #{domain_discriminator_im_forward.1} parent=5 // pred_fallthru
      _
    %p1774 = scmp.le.s32.totalorder 2, %s12
    // Predicated region
    $region45: #{domain_discriminator_im_forward.1} parent=5 // pred_check
      %p1775 = pneg %p1774
    $region46: #{domain_discriminator_im_forward.1} parent=5 // pred_check_branch
      %1777 = sbr.rel (%p1775) target = $region48
    $region47: #{domain_discriminator_im_forward.1} parent=5 // pred_region
      %s1778 = ssub.s32 %s12, 2
      // Predicated region
      $region49: #{domain_discriminator_im_forward.1} parent=47 // pred_check
        %p1779 = pneg %p167
      $region50: #{domain_discriminator_im_forward.1} parent=47 // pred_check_branch
        %1781 = sbr.rel (%p1779) target = $region52
      $region51: #{domain_discriminator_im_forward.1} parent=47 // pred_region
        %s1782 = smul.u32 2, %s24
        %p1783 = scmp.lt.s32.totalorder %s23, 1
        %s1784 = scalar_select %p1783, %s23, 1
        %p1785 = scmp.lt.s32.totalorder %s1782, 1
        %s1786 = scalar_select %p1785, %s1782, 1
        %s1787 = smul.addr %s1784, 2
        %s1788 = sadd.s32 %s1786, %s1787
        %s1789 = scalar_lea.vmem %s5, %s1788
      $region52: #{domain_discriminator_im_forward.1} parent=47 // pred_fallthru
        _
    $region48: #{domain_discriminator_im_forward.1} parent=5 // pred_fallthru
      _
  $region6: #{domain_discriminator_im_forward.1} parent=0 // loop_footer
    %s16 = sadd.s32 1, %s12
  $region7: #{domain_discriminator_im_forward.1} parent=0 // loop_footer_branch
    %11 = sbr.rel target = $region3
  $region8: #{domain_discriminator_im_forward.1} parent=0 // loop_exit
    _

</llo_original>
